<compile_context>
chip_gen: v7x
topology: tpu7x:2x2x1
jax: 0.10.0
libtpu: 0.0.40
codegen_flags: <defaults>
</compile_context>

<pallas_src>
import jax
import jax.numpy as jnp
from jax.experimental import pallas as pl
from jax.experimental.pallas import tpu as pltpu

# ----------------------------- configuration --------------------------------
BATCH = 2
HIDDEN = 32          # hiddenSize (no bidirection -> self.hiddenSize = hiddenSize)
OUTPUT = 16          # outputSize
SEQ = 8              # seq length of x (unused by compute, matches forward signature)
N_STEPS = 4          # the decoder always unrolls 4 steps
LEE_ITERS = 8        # Lee-oscillator inner iterations
LEE_A = (1.0, 1.0, 1.0, 1.0)
LEE_B = (0.6, 0.6, -0.5, 0.5)
LEE_K = 50.0


def _lee_tanh(x):
    """Lee-oscillator chaotic tanh activation, EUP-chain-optimized.

    Strength-reduced (LEE_A == (1,1,1,1), iteration 0 peeled) and EUP-packed: the
    two independent tanh arguments of each Lee iteration are lane-concatenated and
    evaluated with a single jnp.tanh, halving the serial transcendental chain.
    Elementwise tanh on the packed vreg is bitwise identical to two separate calls,
    so this is mathematically exact vs. the original fixed-point iteration.
    """
    H = x.shape[-1]
    bx = LEE_B[3] * x                      # loop-invariant, hoisted
    decay = jnp.exp(-LEE_K * x * x)

    # --- peeled iteration 0 (u = v = z = 0), packed prologue ------------------
    #   u1 = tanh(x) = w ; v1 = tanh(-b3*x) ; z1 = (u1 - v1)*decay + w
    wv = jnp.tanh(jnp.concatenate([x, -bx], axis=-1))       # one EUP issue
    w = wv[:, :H]
    v = wv[:, H:]
    u = w
    z = (u - v) * decay + w

    # --- remaining iterations: one packed tanh per iteration ------------------
    for _ in range(LEE_ITERS - 1):
        arg_u = u + z - v + x                                        # LEE_A all 1.0
        arg_v = LEE_B[2] * z - LEE_B[1] * u + LEE_B[0] * v - bx
        uv = jnp.tanh(jnp.concatenate([arg_u, arg_v], axis=-1))     # one EUP issue
        u = uv[:, :H]
        v = uv[:, H:]
        z = (u - v) * decay + w
    return z


# ------------------------------- kernel -------------------------------------
def chaotic_decoder_kernel(wi_ref, wh_ref, b_ref, wfc_ref, bfc_ref, out_ref):
    """Runs the 4 chaotic-RNN decode steps + final fc entirely in vregs/VMEM.

    wi_ref : (H, H)   RNN input weights
    wh_ref : (H, H)   RNN hidden weights
    b_ref  : (1, H)   RNN bias
    wfc_ref: (4H, O)  fc weights (transposed torch layout)
    bfc_ref: (1, O)   fc bias
    out_ref: (B, O)   result
    """
    H = wi_ref.shape[0]
    bs = out_ref.shape[0]

    # fused recurrence weight: ht @ Wi + ht @ Wh == ht @ (Wi + Wh)   (one VPU add)
    W = wi_ref[...] + wh_ref[...]
    b = b_ref[...]

    # --- step 0 (peeled): ht == 0  =>  pre == bias broadcast ------------------
    ht = _lee_tanh(jnp.broadcast_to(b, (bs, H)))
    hts = [ht]

    # --- steps 1..3: recurrence, ht stays vreg-resident ------------------------
    for _ in range(1, N_STEPS):
        pre = jnp.dot(ht, W, preferred_element_type=jnp.float32) + b
        ht = _lee_tanh(pre)
        hts.append(ht)

    # --- single fc: lane-concat to (bs, 4H = 128) then one K=128 matmul --------
    cat = jnp.concatenate(hts, axis=-1)
    out_ref[...] = (jnp.dot(cat, wfc_ref[...], preferred_element_type=jnp.float32)
                    + bfc_ref[...])


# ------------------------------ wrapper --------------------------------------
def chaotic_decoder_forward(x, params):
    """x: (B, S, H) float32 (only the batch dim is used when attention is disabled)."""
    bs = x.shape[0]
    O = OUTPUT
    wi, wh, b, wfc, bfc = params

    vmem_spec = pl.BlockSpec(memory_space=pltpu.MemorySpace.VMEM)
    out = pl.pallas_call(
        chaotic_decoder_kernel,
        out_shape=jax.ShapeDtypeStruct((bs, O), jnp.float32),
        in_specs=[vmem_spec] * 5,
        out_specs=vmem_spec,
    )(wi, wh, b, wfc, bfc)
    return out


# --------------------------- pure-JAX reference ------------------------------
def _lee_tanh_ref(x):
    """Unpacked, un-peeled Lee-oscillator tanh (validates the kernel's packing)."""
    w = jnp.tanh(x)
    decay = jnp.exp(-LEE_K * x * x)
    u = jnp.zeros_like(x)
    v = jnp.zeros_like(x)
    z = jnp.zeros_like(x)
    for _ in range(LEE_ITERS):
        u_new = jnp.tanh(LEE_A[0] * u + LEE_A[1] * z - LEE_A[2] * v + LEE_A[3] * x)
        v_new = jnp.tanh(LEE_B[2] * z - LEE_B[1] * u + LEE_B[0] * v - LEE_B[3] * x)
        u, v = u_new, v_new
        z = (u - v) * decay + w
    return z


def chaotic_decoder_reference(x, params):
    """Faithful (unfused) form of the PyTorch forward for validation."""
    wi, wh, b, wfc, bfc = params
    bs = x.shape[0]
    ht = jnp.zeros((bs, HIDDEN), jnp.float32)
    outs = []
    for _ in range(N_STEPS):
        pre = ht @ wi + ht @ wh + b
        ht = _lee_tanh_ref(pre)
        outs.append(ht)
    cat = jnp.concatenate(outs, axis=1)
    return cat @ wfc + bfc


# ------------------------------- main ----------------------------------------
def init_params(key):
    k1, k2, k3, k4, k5 = jax.random.split(key, 5)
    scale_rnn = 1.0 / jnp.sqrt(HIDDEN)
    scale_fc = 1.0 / jnp.sqrt(N_STEPS * HIDDEN)
    wi = jax.random.uniform(k1, (HIDDEN, HIDDEN), jnp.float32, -scale_rnn, scale_rnn)
    wh = jax.random.uniform(k2, (HIDDEN, HIDDEN), jnp.float32, -scale_rnn, scale_rnn)
    b = jax.random.uniform(k3, (1, HIDDEN), jnp.float32, -scale_rnn, scale_rnn)
    wfc = jax.random.uniform(k4, (N_STEPS * HIDDEN, OUTPUT), jnp.float32, -scale_fc, scale_fc)
    bfc = jax.random.uniform(k5, (1, OUTPUT), jnp.float32, -scale_fc, scale_fc)
    return wi, wh, b, wfc, bfc


if __name__ == "__main__":
    key = jax.random.PRNGKey(0)
    pkey, xkey = jax.random.split(key)
    params = init_params(pkey)
    x = jax.random.normal(xkey, (BATCH, SEQ, HIDDEN), jnp.float32)

    out = chaotic_decoder_forward(x, params)
    out = jax.block_until_ready(out)

    ref = chaotic_decoder_reference(x, params)
    assert out.shape == (BATCH, OUTPUT)
    # tolerance covers the (algebraically exact) Wi+Wh fusion rounding difference;
    # the packed tanh and single K=128 fc matmul match the reference order exactly.
    assert jnp.allclose(out, ref, atol=1e-4, rtol=1e-4), "mismatch vs. reference"

    print("KERNEL_OK")
</pallas_src>

<mosaic_0001>
module attributes {stable_mosaic.version = 11 : i64} {
  func.func @chaotic_decoder_kernel(%arg0: memref<32x32xf32, #tpu.memory_space<vmem>>, %arg1: memref<32x32xf32, #tpu.memory_space<vmem>>, %arg2: memref<1x32xf32, #tpu.memory_space<vmem>>, %arg3: memref<128x16xf32, #tpu.memory_space<vmem>>, %arg4: memref<1x16xf32, #tpu.memory_space<vmem>>, %arg5: memref<2x16xf32, #tpu.memory_space<vmem>>) attributes {dimension_semantics = [], scalar_prefetch = 0 : i64, scratch_operands = 0 : i64, tpu.core_type = #tpu.core_type<tc>} {
    %c0 = arith.constant 0 : index
    %c0_0 = arith.constant 0 : index
    %0 = vector.load %arg0[%c0, %c0_0] : memref<32x32xf32, #tpu.memory_space<vmem>>, vector<32x32xf32>
    %c0_1 = arith.constant 0 : index
    %c0_2 = arith.constant 0 : index
    %1 = vector.load %arg1[%c0_1, %c0_2] : memref<32x32xf32, #tpu.memory_space<vmem>>, vector<32x32xf32>
    %2 = arith.addf %0, %1 : vector<32x32xf32>
    %c0_3 = arith.constant 0 : index
    %c0_4 = arith.constant 0 : index
    %3 = vector.load %arg2[%c0_3, %c0_4] : memref<1x32xf32, #tpu.memory_space<vmem>>, vector<1x32xf32>
    %4 = vector.shape_cast %3 : vector<1x32xf32> to vector<1x32xf32>
    %5 = vector.broadcast %4 : vector<1x32xf32> to vector<2x32xf32>
    %cst = arith.constant 5.000000e-01 : f32
    %6 = vector.broadcast %cst : f32 to vector<2x32xf32>
    %7 = arith.mulf %6, %5 : vector<2x32xf32>
    %cst_5 = arith.constant -5.000000e+01 : f32
    %8 = vector.broadcast %cst_5 : f32 to vector<2x32xf32>
    %9 = arith.mulf %8, %5 : vector<2x32xf32>
    %10 = arith.mulf %9, %5 : vector<2x32xf32>
    %11 = math.exp %10 : vector<2x32xf32>
    %cst_6 = arith.constant 0.000000e+00 : f32
    %12 = vector.broadcast %cst_6 : f32 to vector<2x32xf32>
    %13 = arith.subf %12, %7 : vector<2x32xf32>
    %14 = tpu.concatenate %5, %13 in 1 : vector<2x32xf32>, vector<2x32xf32> -> vector<2x64xf32>
    %15 = math.tanh %14 : vector<2x64xf32>
    %16 = vector.extract_strided_slice %15 {offsets = [0, 0], sizes = [2, 32], strides = [1, 1]} : vector<2x64xf32> to vector<2x32xf32>
    %17 = vector.extract_strided_slice %15 {offsets = [0, 32], sizes = [2, 32], strides = [1, 1]} : vector<2x64xf32> to vector<2x32xf32>
    %18 = arith.subf %16, %17 : vector<2x32xf32>
    %19 = arith.mulf %18, %11 : vector<2x32xf32>
    %20 = arith.addf %19, %16 : vector<2x32xf32>
    %21 = arith.addf %16, %20 : vector<2x32xf32>
    %22 = arith.subf %21, %17 : vector<2x32xf32>
    %23 = arith.addf %22, %5 : vector<2x32xf32>
    %cst_7 = arith.constant -5.000000e-01 : f32
    %24 = vector.broadcast %cst_7 : f32 to vector<2x32xf32>
    %25 = arith.mulf %24, %20 : vector<2x32xf32>
    %cst_8 = arith.constant 6.000000e-01 : f32
    %26 = vector.broadcast %cst_8 : f32 to vector<2x32xf32>
    %27 = arith.mulf %26, %16 : vector<2x32xf32>
    %28 = arith.subf %25, %27 : vector<2x32xf32>
    %cst_9 = arith.constant 6.000000e-01 : f32
    %29 = vector.broadcast %cst_9 : f32 to vector<2x32xf32>
    %30 = arith.mulf %29, %17 : vector<2x32xf32>
    %31 = arith.addf %28, %30 : vector<2x32xf32>
    %32 = arith.subf %31, %7 : vector<2x32xf32>
    %33 = tpu.concatenate %23, %32 in 1 : vector<2x32xf32>, vector<2x32xf32> -> vector<2x64xf32>
    %34 = math.tanh %33 : vector<2x64xf32>
    %35 = vector.extract_strided_slice %34 {offsets = [0, 0], sizes = [2, 32], strides = [1, 1]} : vector<2x64xf32> to vector<2x32xf32>
    %36 = vector.extract_strided_slice %34 {offsets = [0, 32], sizes = [2, 32], strides = [1, 1]} : vector<2x64xf32> to vector<2x32xf32>
    %37 = arith.subf %35, %36 : vector<2x32xf32>
    %38 = arith.mulf %37, %11 : vector<2x32xf32>
    %39 = arith.addf %38, %16 : vector<2x32xf32>
    %40 = arith.addf %35, %39 : vector<2x32xf32>
    %41 = arith.subf %40, %36 : vector<2x32xf32>
    %42 = arith.addf %41, %5 : vector<2x32xf32>
    %cst_10 = arith.constant -5.000000e-01 : f32
    %43 = vector.broadcast %cst_10 : f32 to vector<2x32xf32>
    %44 = arith.mulf %43, %39 : vector<2x32xf32>
    %cst_11 = arith.constant 6.000000e-01 : f32
    %45 = vector.broadcast %cst_11 : f32 to vector<2x32xf32>
    %46 = arith.mulf %45, %35 : vector<2x32xf32>
    %47 = arith.subf %44, %46 : vector<2x32xf32>
    %cst_12 = arith.constant 6.000000e-01 : f32
    %48 = vector.broadcast %cst_12 : f32 to vector<2x32xf32>
    %49 = arith.mulf %48, %36 : vector<2x32xf32>
    %50 = arith.addf %47, %49 : vector<2x32xf32>
    %51 = arith.subf %50, %7 : vector<2x32xf32>
    %52 = tpu.concatenate %42, %51 in 1 : vector<2x32xf32>, vector<2x32xf32> -> vector<2x64xf32>
    %53 = math.tanh %52 : vector<2x64xf32>
    %54 = vector.extract_strided_slice %53 {offsets = [0, 0], sizes = [2, 32], strides = [1, 1]} : vector<2x64xf32> to vector<2x32xf32>
    %55 = vector.extract_strided_slice %53 {offsets = [0, 32], sizes = [2, 32], strides = [1, 1]} : vector<2x64xf32> to vector<2x32xf32>
    %56 = arith.subf %54, %55 : vector<2x32xf32>
    %57 = arith.mulf %56, %11 : vector<2x32xf32>
    %58 = arith.addf %57, %16 : vector<2x32xf32>
    %59 = arith.addf %54, %58 : vector<2x32xf32>
    %60 = arith.subf %59, %55 : vector<2x32xf32>
    %61 = arith.addf %60, %5 : vector<2x32xf32>
    %cst_13 = arith.constant -5.000000e-01 : f32
    %62 = vector.broadcast %cst_13 : f32 to vector<2x32xf32>
    %63 = arith.mulf %62, %58 : vector<2x32xf32>
    %cst_14 = arith.constant 6.000000e-01 : f32
    %64 = vector.broadcast %cst_14 : f32 to vector<2x32xf32>
    %65 = arith.mulf %64, %54 : vector<2x32xf32>
    %66 = arith.subf %63, %65 : vector<2x32xf32>
    %cst_15 = arith.constant 6.000000e-01 : f32
    %67 = vector.broadcast %cst_15 : f32 to vector<2x32xf32>
    %68 = arith.mulf %67, %55 : vector<2x32xf32>
    %69 = arith.addf %66, %68 : vector<2x32xf32>
    %70 = arith.subf %69, %7 : vector<2x32xf32>
    %71 = tpu.concatenate %61, %70 in 1 : vector<2x32xf32>, vector<2x32xf32> -> vector<2x64xf32>
    %72 = math.tanh %71 : vector<2x64xf32>
    %73 = vector.extract_strided_slice %72 {offsets = [0, 0], sizes = [2, 32], strides = [1, 1]} : vector<2x64xf32> to vector<2x32xf32>
    %74 = vector.extract_strided_slice %72 {offsets = [0, 32], sizes = [2, 32], strides = [1, 1]} : vector<2x64xf32> to vector<2x32xf32>
    %75 = arith.subf %73, %74 : vector<2x32xf32>
    %76 = arith.mulf %75, %11 : vector<2x32xf32>
    %77 = arith.addf %76, %16 : vector<2x32xf32>
    %78 = arith.addf %73, %77 : vector<2x32xf32>
    %79 = arith.subf %78, %74 : vector<2x32xf32>
    %80 = arith.addf %79, %5 : vector<2x32xf32>
    %cst_16 = arith.constant -5.000000e-01 : f32
    %81 = vector.broadcast %cst_16 : f32 to vector<2x32xf32>
    %82 = arith.mulf %81, %77 : vector<2x32xf32>
    %cst_17 = arith.constant 6.000000e-01 : f32
    %83 = vector.broadcast %cst_17 : f32 to vector<2x32xf32>
    %84 = arith.mulf %83, %73 : vector<2x32xf32>
    %85 = arith.subf %82, %84 : vector<2x32xf32>
    %cst_18 = arith.constant 6.000000e-01 : f32
    %86 = vector.broadcast %cst_18 : f32 to vector<2x32xf32>
    %87 = arith.mulf %86, %74 : vector<2x32xf32>
    %88 = arith.addf %85, %87 : vector<2x32xf32>
    %89 = arith.subf %88, %7 : vector<2x32xf32>
    %90 = tpu.concatenate %80, %89 in 1 : vector<2x32xf32>, vector<2x32xf32> -> vector<2x64xf32>
    %91 = math.tanh %90 : vector<2x64xf32>
    %92 = vector.extract_strided_slice %91 {offsets = [0, 0], sizes = [2, 32], strides = [1, 1]} : vector<2x64xf32> to vector<2x32xf32>
    %93 = vector.extract_strided_slice %91 {offsets = [0, 32], sizes = [2, 32], strides = [1, 1]} : vector<2x64xf32> to vector<2x32xf32>
    %94 = arith.subf %92, %93 : vector<2x32xf32>
    %95 = arith.mulf %94, %11 : vector<2x32xf32>
    %96 = arith.addf %95, %16 : vector<2x32xf32>
    %97 = arith.addf %92, %96 : vector<2x32xf32>
    %98 = arith.subf %97, %93 : vector<2x32xf32>
    %99 = arith.addf %98, %5 : vector<2x32xf32>
    %cst_19 = arith.constant -5.000000e-01 : f32
    %100 = vector.broadcast %cst_19 : f32 to vector<2x32xf32>
    %101 = arith.mulf %100, %96 : vector<2x32xf32>
    %cst_20 = arith.constant 6.000000e-01 : f32
    %102 = vector.broadcast %cst_20 : f32 to vector<2x32xf32>
    %103 = arith.mulf %102, %92 : vector<2x32xf32>
    %104 = arith.subf %101, %103 : vector<2x32xf32>
    %cst_21 = arith.constant 6.000000e-01 : f32
    %105 = vector.broadcast %cst_21 : f32 to vector<2x32xf32>
    %106 = arith.mulf %105, %93 : vector<2x32xf32>
    %107 = arith.addf %104, %106 : vector<2x32xf32>
    %108 = arith.subf %107, %7 : vector<2x32xf32>
    %109 = tpu.concatenate %99, %108 in 1 : vector<2x32xf32>, vector<2x32xf32> -> vector<2x64xf32>
    %110 = math.tanh %109 : vector<2x64xf32>
    %111 = vector.extract_strided_slice %110 {offsets = [0, 0], sizes = [2, 32], strides = [1, 1]} : vector<2x64xf32> to vector<2x32xf32>
    %112 = vector.extract_strided_slice %110 {offsets = [0, 32], sizes = [2, 32], strides = [1, 1]} : vector<2x64xf32> to vector<2x32xf32>
    %113 = arith.subf %111, %112 : vector<2x32xf32>
    %114 = arith.mulf %113, %11 : vector<2x32xf32>
    %115 = arith.addf %114, %16 : vector<2x32xf32>
    %116 = arith.addf %111, %115 : vector<2x32xf32>
    %117 = arith.subf %116, %112 : vector<2x32xf32>
    %118 = arith.addf %117, %5 : vector<2x32xf32>
    %cst_22 = arith.constant -5.000000e-01 : f32
    %119 = vector.broadcast %cst_22 : f32 to vector<2x32xf32>
    %120 = arith.mulf %119, %115 : vector<2x32xf32>
    %cst_23 = arith.constant 6.000000e-01 : f32
    %121 = vector.broadcast %cst_23 : f32 to vector<2x32xf32>
    %122 = arith.mulf %121, %111 : vector<2x32xf32>
    %123 = arith.subf %120, %122 : vector<2x32xf32>
    %cst_24 = arith.constant 6.000000e-01 : f32
    %124 = vector.broadcast %cst_24 : f32 to vector<2x32xf32>
    %125 = arith.mulf %124, %112 : vector<2x32xf32>
    %126 = arith.addf %123, %125 : vector<2x32xf32>
    %127 = arith.subf %126, %7 : vector<2x32xf32>
    %128 = tpu.concatenate %118, %127 in 1 : vector<2x32xf32>, vector<2x32xf32> -> vector<2x64xf32>
    %129 = math.tanh %128 : vector<2x64xf32>
    %130 = vector.extract_strided_slice %129 {offsets = [0, 0], sizes = [2, 32], strides = [1, 1]} : vector<2x64xf32> to vector<2x32xf32>
    %131 = vector.extract_strided_slice %129 {offsets = [0, 32], sizes = [2, 32], strides = [1, 1]} : vector<2x64xf32> to vector<2x32xf32>
    %132 = arith.subf %130, %131 : vector<2x32xf32>
    %133 = arith.mulf %132, %11 : vector<2x32xf32>
    %134 = arith.addf %133, %16 : vector<2x32xf32>
    %135 = arith.addf %130, %134 : vector<2x32xf32>
    %136 = arith.subf %135, %131 : vector<2x32xf32>
    %137 = arith.addf %136, %5 : vector<2x32xf32>
    %cst_25 = arith.constant -5.000000e-01 : f32
    %138 = vector.broadcast %cst_25 : f32 to vector<2x32xf32>
    %139 = arith.mulf %138, %134 : vector<2x32xf32>
    %cst_26 = arith.constant 6.000000e-01 : f32
    %140 = vector.broadcast %cst_26 : f32 to vector<2x32xf32>
    %141 = arith.mulf %140, %130 : vector<2x32xf32>
    %142 = arith.subf %139, %141 : vector<2x32xf32>
    %cst_27 = arith.constant 6.000000e-01 : f32
    %143 = vector.broadcast %cst_27 : f32 to vector<2x32xf32>
    %144 = arith.mulf %143, %131 : vector<2x32xf32>
    %145 = arith.addf %142, %144 : vector<2x32xf32>
    %146 = arith.subf %145, %7 : vector<2x32xf32>
    %147 = tpu.concatenate %137, %146 in 1 : vector<2x32xf32>, vector<2x32xf32> -> vector<2x64xf32>
    %148 = math.tanh %147 : vector<2x64xf32>
    %149 = vector.extract_strided_slice %148 {offsets = [0, 0], sizes = [2, 32], strides = [1, 1]} : vector<2x64xf32> to vector<2x32xf32>
    %150 = vector.extract_strided_slice %148 {offsets = [0, 32], sizes = [2, 32], strides = [1, 1]} : vector<2x64xf32> to vector<2x32xf32>
    %151 = arith.subf %149, %150 : vector<2x32xf32>
    %152 = arith.mulf %151, %11 : vector<2x32xf32>
    %153 = arith.addf %152, %16 : vector<2x32xf32>
    %cst_28 = arith.constant dense<0.000000e+00> : vector<2x32xf32>
    %154 = tpu.matmul %153, %2, %cst_28 {dimension_numbers = #tpu.dot_dimension_numbers<[1], [0], [0], [1], [0, 0, 1, 1], [], []>} : vector<2x32xf32>, vector<32x32xf32>, vector<2x32xf32> -> vector<2x32xf32>
    %155 = vector.broadcast %3 : vector<1x32xf32> to vector<2x32xf32>
    %156 = arith.addf %154, %155 : vector<2x32xf32>
    %cst_29 = arith.constant 5.000000e-01 : f32
    %157 = vector.broadcast %cst_29 : f32 to vector<2x32xf32>
    %158 = arith.mulf %157, %156 : vector<2x32xf32>
    %cst_30 = arith.constant -5.000000e+01 : f32
    %159 = vector.broadcast %cst_30 : f32 to vector<2x32xf32>
    %160 = arith.mulf %159, %156 : vector<2x32xf32>
    %161 = arith.mulf %160, %156 : vector<2x32xf32>
    %162 = math.exp %161 : vector<2x32xf32>
    %cst_31 = arith.constant 0.000000e+00 : f32
    %163 = vector.broadcast %cst_31 : f32 to vector<2x32xf32>
    %164 = arith.subf %163, %158 : vector<2x32xf32>
    %165 = tpu.concatenate %156, %164 in 1 : vector<2x32xf32>, vector<2x32xf32> -> vector<2x64xf32>
    %166 = math.tanh %165 : vector<2x64xf32>
    %167 = vector.extract_strided_slice %166 {offsets = [0, 0], sizes = [2, 32], strides = [1, 1]} : vector<2x64xf32> to vector<2x32xf32>
    %168 = vector.extract_strided_slice %166 {offsets = [0, 32], sizes = [2, 32], strides = [1, 1]} : vector<2x64xf32> to vector<2x32xf32>
    %169 = arith.subf %167, %168 : vector<2x32xf32>
    %170 = arith.mulf %169, %162 : vector<2x32xf32>
    %171 = arith.addf %170, %167 : vector<2x32xf32>
    %172 = arith.addf %167, %171 : vector<2x32xf32>
    %173 = arith.subf %172, %168 : vector<2x32xf32>
    %174 = arith.addf %173, %156 : vector<2x32xf32>
    %cst_32 = arith.constant -5.000000e-01 : f32
    %175 = vector.broadcast %cst_32 : f32 to vector<2x32xf32>
    %176 = arith.mulf %175, %171 : vector<2x32xf32>
    %cst_33 = arith.constant 6.000000e-01 : f32
    %177 = vector.broadcast %cst_33 : f32 to vector<2x32xf32>
    %178 = arith.mulf %177, %167 : vector<2x32xf32>
    %179 = arith.subf %176, %178 : vector<2x32xf32>
    %cst_34 = arith.constant 6.000000e-01 : f32
    %180 = vector.broadcast %cst_34 : f32 to vector<2x32xf32>
    %181 = arith.mulf %180, %168 : vector<2x32xf32>
    %182 = arith.addf %179, %181 : vector<2x32xf32>
    %183 = arith.subf %182, %158 : vector<2x32xf32>
    %184 = tpu.concatenate %174, %183 in 1 : vector<2x32xf32>, vector<2x32xf32> -> vector<2x64xf32>
    %185 = math.tanh %184 : vector<2x64xf32>
    %186 = vector.extract_strided_slice %185 {offsets = [0, 0], sizes = [2, 32], strides = [1, 1]} : vector<2x64xf32> to vector<2x32xf32>
    %187 = vector.extract_strided_slice %185 {offsets = [0, 32], sizes = [2, 32], strides = [1, 1]} : vector<2x64xf32> to vector<2x32xf32>
    %188 = arith.subf %186, %187 : vector<2x32xf32>
    %189 = arith.mulf %188, %162 : vector<2x32xf32>
    %190 = arith.addf %189, %167 : vector<2x32xf32>
    %191 = arith.addf %186, %190 : vector<2x32xf32>
    %192 = arith.subf %191, %187 : vector<2x32xf32>
    %193 = arith.addf %192, %156 : vector<2x32xf32>
    %cst_35 = arith.constant -5.000000e-01 : f32
    %194 = vector.broadcast %cst_35 : f32 to vector<2x32xf32>
    %195 = arith.mulf %194, %190 : vector<2x32xf32>
    %cst_36 = arith.constant 6.000000e-01 : f32
    %196 = vector.broadcast %cst_36 : f32 to vector<2x32xf32>
    %197 = arith.mulf %196, %186 : vector<2x32xf32>
    %198 = arith.subf %195, %197 : vector<2x32xf32>
    %cst_37 = arith.constant 6.000000e-01 : f32
    %199 = vector.broadcast %cst_37 : f32 to vector<2x32xf32>
    %200 = arith.mulf %199, %187 : vector<2x32xf32>
    %201 = arith.addf %198, %200 : vector<2x32xf32>
    %202 = arith.subf %201, %158 : vector<2x32xf32>
    %203 = tpu.concatenate %193, %202 in 1 : vector<2x32xf32>, vector<2x32xf32> -> vector<2x64xf32>
    %204 = math.tanh %203 : vector<2x64xf32>
    %205 = vector.extract_strided_slice %204 {offsets = [0, 0], sizes = [2, 32], strides = [1, 1]} : vector<2x64xf32> to vector<2x32xf32>
    %206 = vector.extract_strided_slice %204 {offsets = [0, 32], sizes = [2, 32], strides = [1, 1]} : vector<2x64xf32> to vector<2x32xf32>
    %207 = arith.subf %205, %206 : vector<2x32xf32>
    %208 = arith.mulf %207, %162 : vector<2x32xf32>
    %209 = arith.addf %208, %167 : vector<2x32xf32>
    %210 = arith.addf %205, %209 : vector<2x32xf32>
    %211 = arith.subf %210, %206 : vector<2x32xf32>
    %212 = arith.addf %211, %156 : vector<2x32xf32>
    %cst_38 = arith.constant -5.000000e-01 : f32
    %213 = vector.broadcast %cst_38 : f32 to vector<2x32xf32>
    %214 = arith.mulf %213, %209 : vector<2x32xf32>
    %cst_39 = arith.constant 6.000000e-01 : f32
    %215 = vector.broadcast %cst_39 : f32 to vector<2x32xf32>
    %216 = arith.mulf %215, %205 : vector<2x32xf32>
    %217 = arith.subf %214, %216 : vector<2x32xf32>
    %cst_40 = arith.constant 6.000000e-01 : f32
    %218 = vector.broadcast %cst_40 : f32 to vector<2x32xf32>
    %219 = arith.mulf %218, %206 : vector<2x32xf32>
    %220 = arith.addf %217, %219 : vector<2x32xf32>
    %221 = arith.subf %220, %158 : vector<2x32xf32>
    %222 = tpu.concatenate %212, %221 in 1 : vector<2x32xf32>, vector<2x32xf32> -> vector<2x64xf32>
    %223 = math.tanh %222 : vector<2x64xf32>
    %224 = vector.extract_strided_slice %223 {offsets = [0, 0], sizes = [2, 32], strides = [1, 1]} : vector<2x64xf32> to vector<2x32xf32>
    %225 = vector.extract_strided_slice %223 {offsets = [0, 32], sizes = [2, 32], strides = [1, 1]} : vector<2x64xf32> to vector<2x32xf32>
    %226 = arith.subf %224, %225 : vector<2x32xf32>
    %227 = arith.mulf %226, %162 : vector<2x32xf32>
    %228 = arith.addf %227, %167 : vector<2x32xf32>
    %229 = arith.addf %224, %228 : vector<2x32xf32>
    %230 = arith.subf %229, %225 : vector<2x32xf32>
    %231 = arith.addf %230, %156 : vector<2x32xf32>
    %cst_41 = arith.constant -5.000000e-01 : f32
    %232 = vector.broadcast %cst_41 : f32 to vector<2x32xf32>
    %233 = arith.mulf %232, %228 : vector<2x32xf32>
    %cst_42 = arith.constant 6.000000e-01 : f32
    %234 = vector.broadcast %cst_42 : f32 to vector<2x32xf32>
    %235 = arith.mulf %234, %224 : vector<2x32xf32>
    %236 = arith.subf %233, %235 : vector<2x32xf32>
    %cst_43 = arith.constant 6.000000e-01 : f32
    %237 = vector.broadcast %cst_43 : f32 to vector<2x32xf32>
    %238 = arith.mulf %237, %225 : vector<2x32xf32>
    %239 = arith.addf %236, %238 : vector<2x32xf32>
    %240 = arith.subf %239, %158 : vector<2x32xf32>
    %241 = tpu.concatenate %231, %240 in 1 : vector<2x32xf32>, vector<2x32xf32> -> vector<2x64xf32>
    %242 = math.tanh %241 : vector<2x64xf32>
    %243 = vector.extract_strided_slice %242 {offsets = [0, 0], sizes = [2, 32], strides = [1, 1]} : vector<2x64xf32> to vector<2x32xf32>
    %244 = vector.extract_strided_slice %242 {offsets = [0, 32], sizes = [2, 32], strides = [1, 1]} : vector<2x64xf32> to vector<2x32xf32>
    %245 = arith.subf %243, %244 : vector<2x32xf32>
    %246 = arith.mulf %245, %162 : vector<2x32xf32>
    %247 = arith.addf %246, %167 : vector<2x32xf32>
    %248 = arith.addf %243, %247 : vector<2x32xf32>
    %249 = arith.subf %248, %244 : vector<2x32xf32>
    %250 = arith.addf %249, %156 : vector<2x32xf32>
    %cst_44 = arith.constant -5.000000e-01 : f32
    %251 = vector.broadcast %cst_44 : f32 to vector<2x32xf32>
    %252 = arith.mulf %251, %247 : vector<2x32xf32>
    %cst_45 = arith.constant 6.000000e-01 : f32
    %253 = vector.broadcast %cst_45 : f32 to vector<2x32xf32>
    %254 = arith.mulf %253, %243 : vector<2x32xf32>
    %255 = arith.subf %252, %254 : vector<2x32xf32>
    %cst_46 = arith.constant 6.000000e-01 : f32
    %256 = vector.broadcast %cst_46 : f32 to vector<2x32xf32>
    %257 = arith.mulf %256, %244 : vector<2x32xf32>
    %258 = arith.addf %255, %257 : vector<2x32xf32>
    %259 = arith.subf %258, %158 : vector<2x32xf32>
    %260 = tpu.concatenate %250, %259 in 1 : vector<2x32xf32>, vector<2x32xf32> -> vector<2x64xf32>
    %261 = math.tanh %260 : vector<2x64xf32>
    %262 = vector.extract_strided_slice %261 {offsets = [0, 0], sizes = [2, 32], strides = [1, 1]} : vector<2x64xf32> to vector<2x32xf32>
    %263 = vector.extract_strided_slice %261 {offsets = [0, 32], sizes = [2, 32], strides = [1, 1]} : vector<2x64xf32> to vector<2x32xf32>
    %264 = arith.subf %262, %263 : vector<2x32xf32>
    %265 = arith.mulf %264, %162 : vector<2x32xf32>
    %266 = arith.addf %265, %167 : vector<2x32xf32>
    %267 = arith.addf %262, %266 : vector<2x32xf32>
    %268 = arith.subf %267, %263 : vector<2x32xf32>
    %269 = arith.addf %268, %156 : vector<2x32xf32>
    %cst_47 = arith.constant -5.000000e-01 : f32
    %270 = vector.broadcast %cst_47 : f32 to vector<2x32xf32>
    %271 = arith.mulf %270, %266 : vector<2x32xf32>
    %cst_48 = arith.constant 6.000000e-01 : f32
    %272 = vector.broadcast %cst_48 : f32 to vector<2x32xf32>
    %273 = arith.mulf %272, %262 : vector<2x32xf32>
    %274 = arith.subf %271, %273 : vector<2x32xf32>
    %cst_49 = arith.constant 6.000000e-01 : f32
    %275 = vector.broadcast %cst_49 : f32 to vector<2x32xf32>
    %276 = arith.mulf %275, %263 : vector<2x32xf32>
    %277 = arith.addf %274, %276 : vector<2x32xf32>
    %278 = arith.subf %277, %158 : vector<2x32xf32>
    %279 = tpu.concatenate %269, %278 in 1 : vector<2x32xf32>, vector<2x32xf32> -> vector<2x64xf32>
    %280 = math.tanh %279 : vector<2x64xf32>
    %281 = vector.extract_strided_slice %280 {offsets = [0, 0], sizes = [2, 32], strides = [1, 1]} : vector<2x64xf32> to vector<2x32xf32>
    %282 = vector.extract_strided_slice %280 {offsets = [0, 32], sizes = [2, 32], strides = [1, 1]} : vector<2x64xf32> to vector<2x32xf32>
    %283 = arith.subf %281, %282 : vector<2x32xf32>
    %284 = arith.mulf %283, %162 : vector<2x32xf32>
    %285 = arith.addf %284, %167 : vector<2x32xf32>
    %286 = arith.addf %281, %285 : vector<2x32xf32>
    %287 = arith.subf %286, %282 : vector<2x32xf32>
    %288 = arith.addf %287, %156 : vector<2x32xf32>
    %cst_50 = arith.constant -5.000000e-01 : f32
    %289 = vector.broadcast %cst_50 : f32 to vector<2x32xf32>
    %290 = arith.mulf %289, %285 : vector<2x32xf32>
    %cst_51 = arith.constant 6.000000e-01 : f32
    %291 = vector.broadcast %cst_51 : f32 to vector<2x32xf32>
    %292 = arith.mulf %291, %281 : vector<2x32xf32>
    %293 = arith.subf %290, %292 : vector<2x32xf32>
    %cst_52 = arith.constant 6.000000e-01 : f32
    %294 = vector.broadcast %cst_52 : f32 to vector<2x32xf32>
    %295 = arith.mulf %294, %282 : vector<2x32xf32>
    %296 = arith.addf %293, %295 : vector<2x32xf32>
    %297 = arith.subf %296, %158 : vector<2x32xf32>
    %298 = tpu.concatenate %288, %297 in 1 : vector<2x32xf32>, vector<2x32xf32> -> vector<2x64xf32>
    %299 = math.tanh %298 : vector<2x64xf32>
    %300 = vector.extract_strided_slice %299 {offsets = [0, 0], sizes = [2, 32], strides = [1, 1]} : vector<2x64xf32> to vector<2x32xf32>
    %301 = vector.extract_strided_slice %299 {offsets = [0, 32], sizes = [2, 32], strides = [1, 1]} : vector<2x64xf32> to vector<2x32xf32>
    %302 = arith.subf %300, %301 : vector<2x32xf32>
    %303 = arith.mulf %302, %162 : vector<2x32xf32>
    %304 = arith.addf %303, %167 : vector<2x32xf32>
    %cst_53 = arith.constant dense<0.000000e+00> : vector<2x32xf32>
    %305 = tpu.matmul %304, %2, %cst_53 {dimension_numbers = #tpu.dot_dimension_numbers<[1], [0], [0], [1], [0, 0, 1, 1], [], []>} : vector<2x32xf32>, vector<32x32xf32>, vector<2x32xf32> -> vector<2x32xf32>
    %306 = vector.broadcast %3 : vector<1x32xf32> to vector<2x32xf32>
    %307 = arith.addf %305, %306 : vector<2x32xf32>
    %cst_54 = arith.constant 5.000000e-01 : f32
    %308 = vector.broadcast %cst_54 : f32 to vector<2x32xf32>
    %309 = arith.mulf %308, %307 : vector<2x32xf32>
    %cst_55 = arith.constant -5.000000e+01 : f32
    %310 = vector.broadcast %cst_55 : f32 to vector<2x32xf32>
    %311 = arith.mulf %310, %307 : vector<2x32xf32>
    %312 = arith.mulf %311, %307 : vector<2x32xf32>
    %313 = math.exp %312 : vector<2x32xf32>
    %cst_56 = arith.constant 0.000000e+00 : f32
    %314 = vector.broadcast %cst_56 : f32 to vector<2x32xf32>
    %315 = arith.subf %314, %309 : vector<2x32xf32>
    %316 = tpu.concatenate %307, %315 in 1 : vector<2x32xf32>, vector<2x32xf32> -> vector<2x64xf32>
    %317 = math.tanh %316 : vector<2x64xf32>
    %318 = vector.extract_strided_slice %317 {offsets = [0, 0], sizes = [2, 32], strides = [1, 1]} : vector<2x64xf32> to vector<2x32xf32>
    %319 = vector.extract_strided_slice %317 {offsets = [0, 32], sizes = [2, 32], strides = [1, 1]} : vector<2x64xf32> to vector<2x32xf32>
    %320 = arith.subf %318, %319 : vector<2x32xf32>
    %321 = arith.mulf %320, %313 : vector<2x32xf32>
    %322 = arith.addf %321, %318 : vector<2x32xf32>
    %323 = arith.addf %318, %322 : vector<2x32xf32>
    %324 = arith.subf %323, %319 : vector<2x32xf32>
    %325 = arith.addf %324, %307 : vector<2x32xf32>
    %cst_57 = arith.constant -5.000000e-01 : f32
    %326 = vector.broadcast %cst_57 : f32 to vector<2x32xf32>
    %327 = arith.mulf %326, %322 : vector<2x32xf32>
    %cst_58 = arith.constant 6.000000e-01 : f32
    %328 = vector.broadcast %cst_58 : f32 to vector<2x32xf32>
    %329 = arith.mulf %328, %318 : vector<2x32xf32>
    %330 = arith.subf %327, %329 : vector<2x32xf32>
    %cst_59 = arith.constant 6.000000e-01 : f32
    %331 = vector.broadcast %cst_59 : f32 to vector<2x32xf32>
    %332 = arith.mulf %331, %319 : vector<2x32xf32>
    %333 = arith.addf %330, %332 : vector<2x32xf32>
    %334 = arith.subf %333, %309 : vector<2x32xf32>
    %335 = tpu.concatenate %325, %334 in 1 : vector<2x32xf32>, vector<2x32xf32> -> vector<2x64xf32>
    %336 = math.tanh %335 : vector<2x64xf32>
    %337 = vector.extract_strided_slice %336 {offsets = [0, 0], sizes = [2, 32], strides = [1, 1]} : vector<2x64xf32> to vector<2x32xf32>
    %338 = vector.extract_strided_slice %336 {offsets = [0, 32], sizes = [2, 32], strides = [1, 1]} : vector<2x64xf32> to vector<2x32xf32>
    %339 = arith.subf %337, %338 : vector<2x32xf32>
    %340 = arith.mulf %339, %313 : vector<2x32xf32>
    %341 = arith.addf %340, %318 : vector<2x32xf32>
    %342 = arith.addf %337, %341 : vector<2x32xf32>
    %343 = arith.subf %342, %338 : vector<2x32xf32>
    %344 = arith.addf %343, %307 : vector<2x32xf32>
    %cst_60 = arith.constant -5.000000e-01 : f32
    %345 = vector.broadcast %cst_60 : f32 to vector<2x32xf32>
    %346 = arith.mulf %345, %341 : vector<2x32xf32>
    %cst_61 = arith.constant 6.000000e-01 : f32
    %347 = vector.broadcast %cst_61 : f32 to vector<2x32xf32>
    %348 = arith.mulf %347, %337 : vector<2x32xf32>
    %349 = arith.subf %346, %348 : vector<2x32xf32>
    %cst_62 = arith.constant 6.000000e-01 : f32
    %350 = vector.broadcast %cst_62 : f32 to vector<2x32xf32>
    %351 = arith.mulf %350, %338 : vector<2x32xf32>
    %352 = arith.addf %349, %351 : vector<2x32xf32>
    %353 = arith.subf %352, %309 : vector<2x32xf32>
    %354 = tpu.concatenate %344, %353 in 1 : vector<2x32xf32>, vector<2x32xf32> -> vector<2x64xf32>
    %355 = math.tanh %354 : vector<2x64xf32>
    %356 = vector.extract_strided_slice %355 {offsets = [0, 0], sizes = [2, 32], strides = [1, 1]} : vector<2x64xf32> to vector<2x32xf32>
    %357 = vector.extract_strided_slice %355 {offsets = [0, 32], sizes = [2, 32], strides = [1, 1]} : vector<2x64xf32> to vector<2x32xf32>
    %358 = arith.subf %356, %357 : vector<2x32xf32>
    %359 = arith.mulf %358, %313 : vector<2x32xf32>
    %360 = arith.addf %359, %318 : vector<2x32xf32>
    %361 = arith.addf %356, %360 : vector<2x32xf32>
    %362 = arith.subf %361, %357 : vector<2x32xf32>
    %363 = arith.addf %362, %307 : vector<2x32xf32>
    %cst_63 = arith.constant -5.000000e-01 : f32
    %364 = vector.broadcast %cst_63 : f32 to vector<2x32xf32>
    %365 = arith.mulf %364, %360 : vector<2x32xf32>
    %cst_64 = arith.constant 6.000000e-01 : f32
    %366 = vector.broadcast %cst_64 : f32 to vector<2x32xf32>
    %367 = arith.mulf %366, %356 : vector<2x32xf32>
    %368 = arith.subf %365, %367 : vector<2x32xf32>
    %cst_65 = arith.constant 6.000000e-01 : f32
    %369 = vector.broadcast %cst_65 : f32 to vector<2x32xf32>
    %370 = arith.mulf %369, %357 : vector<2x32xf32>
    %371 = arith.addf %368, %370 : vector<2x32xf32>
    %372 = arith.subf %371, %309 : vector<2x32xf32>
    %373 = tpu.concatenate %363, %372 in 1 : vector<2x32xf32>, vector<2x32xf32> -> vector<2x64xf32>
    %374 = math.tanh %373 : vector<2x64xf32>
    %375 = vector.extract_strided_slice %374 {offsets = [0, 0], sizes = [2, 32], strides = [1, 1]} : vector<2x64xf32> to vector<2x32xf32>
    %376 = vector.extract_strided_slice %374 {offsets = [0, 32], sizes = [2, 32], strides = [1, 1]} : vector<2x64xf32> to vector<2x32xf32>
    %377 = arith.subf %375, %376 : vector<2x32xf32>
    %378 = arith.mulf %377, %313 : vector<2x32xf32>
    %379 = arith.addf %378, %318 : vector<2x32xf32>
    %380 = arith.addf %375, %379 : vector<2x32xf32>
    %381 = arith.subf %380, %376 : vector<2x32xf32>
    %382 = arith.addf %381, %307 : vector<2x32xf32>
    %cst_66 = arith.constant -5.000000e-01 : f32
    %383 = vector.broadcast %cst_66 : f32 to vector<2x32xf32>
    %384 = arith.mulf %383, %379 : vector<2x32xf32>
    %cst_67 = arith.constant 6.000000e-01 : f32
    %385 = vector.broadcast %cst_67 : f32 to vector<2x32xf32>
    %386 = arith.mulf %385, %375 : vector<2x32xf32>
    %387 = arith.subf %384, %386 : vector<2x32xf32>
    %cst_68 = arith.constant 6.000000e-01 : f32
    %388 = vector.broadcast %cst_68 : f32 to vector<2x32xf32>
    %389 = arith.mulf %388, %376 : vector<2x32xf32>
    %390 = arith.addf %387, %389 : vector<2x32xf32>
    %391 = arith.subf %390, %309 : vector<2x32xf32>
    %392 = tpu.concatenate %382, %391 in 1 : vector<2x32xf32>, vector<2x32xf32> -> vector<2x64xf32>
    %393 = math.tanh %392 : vector<2x64xf32>
    %394 = vector.extract_strided_slice %393 {offsets = [0, 0], sizes = [2, 32], strides = [1, 1]} : vector<2x64xf32> to vector<2x32xf32>
    %395 = vector.extract_strided_slice %393 {offsets = [0, 32], sizes = [2, 32], strides = [1, 1]} : vector<2x64xf32> to vector<2x32xf32>
    %396 = arith.subf %394, %395 : vector<2x32xf32>
    %397 = arith.mulf %396, %313 : vector<2x32xf32>
    %398 = arith.addf %397, %318 : vector<2x32xf32>
    %399 = arith.addf %394, %398 : vector<2x32xf32>
    %400 = arith.subf %399, %395 : vector<2x32xf32>
    %401 = arith.addf %400, %307 : vector<2x32xf32>
    %cst_69 = arith.constant -5.000000e-01 : f32
    %402 = vector.broadcast %cst_69 : f32 to vector<2x32xf32>
    %403 = arith.mulf %402, %398 : vector<2x32xf32>
    %cst_70 = arith.constant 6.000000e-01 : f32
    %404 = vector.broadcast %cst_70 : f32 to vector<2x32xf32>
    %405 = arith.mulf %404, %394 : vector<2x32xf32>
    %406 = arith.subf %403, %405 : vector<2x32xf32>
    %cst_71 = arith.constant 6.000000e-01 : f32
    %407 = vector.broadcast %cst_71 : f32 to vector<2x32xf32>
    %408 = arith.mulf %407, %395 : vector<2x32xf32>
    %409 = arith.addf %406, %408 : vector<2x32xf32>
    %410 = arith.subf %409, %309 : vector<2x32xf32>
    %411 = tpu.concatenate %401, %410 in 1 : vector<2x32xf32>, vector<2x32xf32> -> vector<2x64xf32>
    %412 = math.tanh %411 : vector<2x64xf32>
    %413 = vector.extract_strided_slice %412 {offsets = [0, 0], sizes = [2, 32], strides = [1, 1]} : vector<2x64xf32> to vector<2x32xf32>
    %414 = vector.extract_strided_slice %412 {offsets = [0, 32], sizes = [2, 32], strides = [1, 1]} : vector<2x64xf32> to vector<2x32xf32>
    %415 = arith.subf %413, %414 : vector<2x32xf32>
    %416 = arith.mulf %415, %313 : vector<2x32xf32>
    %417 = arith.addf %416, %318 : vector<2x32xf32>
    %418 = arith.addf %413, %417 : vector<2x32xf32>
    %419 = arith.subf %418, %414 : vector<2x32xf32>
    %420 = arith.addf %419, %307 : vector<2x32xf32>
    %cst_72 = arith.constant -5.000000e-01 : f32
    %421 = vector.broadcast %cst_72 : f32 to vector<2x32xf32>
    %422 = arith.mulf %421, %417 : vector<2x32xf32>
    %cst_73 = arith.constant 6.000000e-01 : f32
    %423 = vector.broadcast %cst_73 : f32 to vector<2x32xf32>
    %424 = arith.mulf %423, %413 : vector<2x32xf32>
    %425 = arith.subf %422, %424 : vector<2x32xf32>
    %cst_74 = arith.constant 6.000000e-01 : f32
    %426 = vector.broadcast %cst_74 : f32 to vector<2x32xf32>
    %427 = arith.mulf %426, %414 : vector<2x32xf32>
    %428 = arith.addf %425, %427 : vector<2x32xf32>
    %429 = arith.subf %428, %309 : vector<2x32xf32>
    %430 = tpu.concatenate %420, %429 in 1 : vector<2x32xf32>, vector<2x32xf32> -> vector<2x64xf32>
    %431 = math.tanh %430 : vector<2x64xf32>
    %432 = vector.extract_strided_slice %431 {offsets = [0, 0], sizes = [2, 32], strides = [1, 1]} : vector<2x64xf32> to vector<2x32xf32>
    %433 = vector.extract_strided_slice %431 {offsets = [0, 32], sizes = [2, 32], strides = [1, 1]} : vector<2x64xf32> to vector<2x32xf32>
    %434 = arith.subf %432, %433 : vector<2x32xf32>
    %435 = arith.mulf %434, %313 : vector<2x32xf32>
    %436 = arith.addf %435, %318 : vector<2x32xf32>
    %437 = arith.addf %432, %436 : vector<2x32xf32>
    %438 = arith.subf %437, %433 : vector<2x32xf32>
    %439 = arith.addf %438, %307 : vector<2x32xf32>
    %cst_75 = arith.constant -5.000000e-01 : f32
    %440 = vector.broadcast %cst_75 : f32 to vector<2x32xf32>
    %441 = arith.mulf %440, %436 : vector<2x32xf32>
    %cst_76 = arith.constant 6.000000e-01 : f32
    %442 = vector.broadcast %cst_76 : f32 to vector<2x32xf32>
    %443 = arith.mulf %442, %432 : vector<2x32xf32>
    %444 = arith.subf %441, %443 : vector<2x32xf32>
    %cst_77 = arith.constant 6.000000e-01 : f32
    %445 = vector.broadcast %cst_77 : f32 to vector<2x32xf32>
    %446 = arith.mulf %445, %433 : vector<2x32xf32>
    %447 = arith.addf %444, %446 : vector<2x32xf32>
    %448 = arith.subf %447, %309 : vector<2x32xf32>
    %449 = tpu.concatenate %439, %448 in 1 : vector<2x32xf32>, vector<2x32xf32> -> vector<2x64xf32>
    %450 = math.tanh %449 : vector<2x64xf32>
    %451 = vector.extract_strided_slice %450 {offsets = [0, 0], sizes = [2, 32], strides = [1, 1]} : vector<2x64xf32> to vector<2x32xf32>
    %452 = vector.extract_strided_slice %450 {offsets = [0, 32], sizes = [2, 32], strides = [1, 1]} : vector<2x64xf32> to vector<2x32xf32>
    %453 = arith.subf %451, %452 : vector<2x32xf32>
    %454 = arith.mulf %453, %313 : vector<2x32xf32>
    %455 = arith.addf %454, %318 : vector<2x32xf32>
    %cst_78 = arith.constant dense<0.000000e+00> : vector<2x32xf32>
    %456 = tpu.matmul %455, %2, %cst_78 {dimension_numbers = #tpu.dot_dimension_numbers<[1], [0], [0], [1], [0, 0, 1, 1], [], []>} : vector<2x32xf32>, vector<32x32xf32>, vector<2x32xf32> -> vector<2x32xf32>
    %457 = vector.broadcast %3 : vector<1x32xf32> to vector<2x32xf32>
    %458 = arith.addf %456, %457 : vector<2x32xf32>
    %cst_79 = arith.constant 5.000000e-01 : f32
    %459 = vector.broadcast %cst_79 : f32 to vector<2x32xf32>
    %460 = arith.mulf %459, %458 : vector<2x32xf32>
    %cst_80 = arith.constant -5.000000e+01 : f32
    %461 = vector.broadcast %cst_80 : f32 to vector<2x32xf32>
    %462 = arith.mulf %461, %458 : vector<2x32xf32>
    %463 = arith.mulf %462, %458 : vector<2x32xf32>
    %464 = math.exp %463 : vector<2x32xf32>
    %cst_81 = arith.constant 0.000000e+00 : f32
    %465 = vector.broadcast %cst_81 : f32 to vector<2x32xf32>
    %466 = arith.subf %465, %460 : vector<2x32xf32>
    %467 = tpu.concatenate %458, %466 in 1 : vector<2x32xf32>, vector<2x32xf32> -> vector<2x64xf32>
    %468 = math.tanh %467 : vector<2x64xf32>
    %469 = vector.extract_strided_slice %468 {offsets = [0, 0], sizes = [2, 32], strides = [1, 1]} : vector<2x64xf32> to vector<2x32xf32>
    %470 = vector.extract_strided_slice %468 {offsets = [0, 32], sizes = [2, 32], strides = [1, 1]} : vector<2x64xf32> to vector<2x32xf32>
    %471 = arith.subf %469, %470 : vector<2x32xf32>
    %472 = arith.mulf %471, %464 : vector<2x32xf32>
    %473 = arith.addf %472, %469 : vector<2x32xf32>
    %474 = arith.addf %469, %473 : vector<2x32xf32>
    %475 = arith.subf %474, %470 : vector<2x32xf32>
    %476 = arith.addf %475, %458 : vector<2x32xf32>
    %cst_82 = arith.constant -5.000000e-01 : f32
    %477 = vector.broadcast %cst_82 : f32 to vector<2x32xf32>
    %478 = arith.mulf %477, %473 : vector<2x32xf32>
    %cst_83 = arith.constant 6.000000e-01 : f32
    %479 = vector.broadcast %cst_83 : f32 to vector<2x32xf32>
    %480 = arith.mulf %479, %469 : vector<2x32xf32>
    %481 = arith.subf %478, %480 : vector<2x32xf32>
    %cst_84 = arith.constant 6.000000e-01 : f32
    %482 = vector.broadcast %cst_84 : f32 to vector<2x32xf32>
    %483 = arith.mulf %482, %470 : vector<2x32xf32>
    %484 = arith.addf %481, %483 : vector<2x32xf32>
    %485 = arith.subf %484, %460 : vector<2x32xf32>
    %486 = tpu.concatenate %476, %485 in 1 : vector<2x32xf32>, vector<2x32xf32> -> vector<2x64xf32>
    %487 = math.tanh %486 : vector<2x64xf32>
    %488 = vector.extract_strided_slice %487 {offsets = [0, 0], sizes = [2, 32], strides = [1, 1]} : vector<2x64xf32> to vector<2x32xf32>
    %489 = vector.extract_strided_slice %487 {offsets = [0, 32], sizes = [2, 32], strides = [1, 1]} : vector<2x64xf32> to vector<2x32xf32>
    %490 = arith.subf %488, %489 : vector<2x32xf32>
    %491 = arith.mulf %490, %464 : vector<2x32xf32>
    %492 = arith.addf %491, %469 : vector<2x32xf32>
    %493 = arith.addf %488, %492 : vector<2x32xf32>
    %494 = arith.subf %493, %489 : vector<2x32xf32>
    %495 = arith.addf %494, %458 : vector<2x32xf32>
    %cst_85 = arith.constant -5.000000e-01 : f32
    %496 = vector.broadcast %cst_85 : f32 to vector<2x32xf32>
    %497 = arith.mulf %496, %492 : vector<2x32xf32>
    %cst_86 = arith.constant 6.000000e-01 : f32
    %498 = vector.broadcast %cst_86 : f32 to vector<2x32xf32>
    %499 = arith.mulf %498, %488 : vector<2x32xf32>
    %500 = arith.subf %497, %499 : vector<2x32xf32>
    %cst_87 = arith.constant 6.000000e-01 : f32
    %501 = vector.broadcast %cst_87 : f32 to vector<2x32xf32>
    %502 = arith.mulf %501, %489 : vector<2x32xf32>
    %503 = arith.addf %500, %502 : vector<2x32xf32>
    %504 = arith.subf %503, %460 : vector<2x32xf32>
    %505 = tpu.concatenate %495, %504 in 1 : vector<2x32xf32>, vector<2x32xf32> -> vector<2x64xf32>
    %506 = math.tanh %505 : vector<2x64xf32>
    %507 = vector.extract_strided_slice %506 {offsets = [0, 0], sizes = [2, 32], strides = [1, 1]} : vector<2x64xf32> to vector<2x32xf32>
    %508 = vector.extract_strided_slice %506 {offsets = [0, 32], sizes = [2, 32], strides = [1, 1]} : vector<2x64xf32> to vector<2x32xf32>
    %509 = arith.subf %507, %508 : vector<2x32xf32>
    %510 = arith.mulf %509, %464 : vector<2x32xf32>
    %511 = arith.addf %510, %469 : vector<2x32xf32>
    %512 = arith.addf %507, %511 : vector<2x32xf32>
    %513 = arith.subf %512, %508 : vector<2x32xf32>
    %514 = arith.addf %513, %458 : vector<2x32xf32>
    %cst_88 = arith.constant -5.000000e-01 : f32
    %515 = vector.broadcast %cst_88 : f32 to vector<2x32xf32>
    %516 = arith.mulf %515, %511 : vector<2x32xf32>
    %cst_89 = arith.constant 6.000000e-01 : f32
    %517 = vector.broadcast %cst_89 : f32 to vector<2x32xf32>
    %518 = arith.mulf %517, %507 : vector<2x32xf32>
    %519 = arith.subf %516, %518 : vector<2x32xf32>
    %cst_90 = arith.constant 6.000000e-01 : f32
    %520 = vector.broadcast %cst_90 : f32 to vector<2x32xf32>
    %521 = arith.mulf %520, %508 : vector<2x32xf32>
    %522 = arith.addf %519, %521 : vector<2x32xf32>
    %523 = arith.subf %522, %460 : vector<2x32xf32>
    %524 = tpu.concatenate %514, %523 in 1 : vector<2x32xf32>, vector<2x32xf32> -> vector<2x64xf32>
    %525 = math.tanh %524 : vector<2x64xf32>
    %526 = vector.extract_strided_slice %525 {offsets = [0, 0], sizes = [2, 32], strides = [1, 1]} : vector<2x64xf32> to vector<2x32xf32>
    %527 = vector.extract_strided_slice %525 {offsets = [0, 32], sizes = [2, 32], strides = [1, 1]} : vector<2x64xf32> to vector<2x32xf32>
    %528 = arith.subf %526, %527 : vector<2x32xf32>
    %529 = arith.mulf %528, %464 : vector<2x32xf32>
    %530 = arith.addf %529, %469 : vector<2x32xf32>
    %531 = arith.addf %526, %530 : vector<2x32xf32>
    %532 = arith.subf %531, %527 : vector<2x32xf32>
    %533 = arith.addf %532, %458 : vector<2x32xf32>
    %cst_91 = arith.constant -5.000000e-01 : f32
    %534 = vector.broadcast %cst_91 : f32 to vector<2x32xf32>
    %535 = arith.mulf %534, %530 : vector<2x32xf32>
    %cst_92 = arith.constant 6.000000e-01 : f32
    %536 = vector.broadcast %cst_92 : f32 to vector<2x32xf32>
    %537 = arith.mulf %536, %526 : vector<2x32xf32>
    %538 = arith.subf %535, %537 : vector<2x32xf32>
    %cst_93 = arith.constant 6.000000e-01 : f32
    %539 = vector.broadcast %cst_93 : f32 to vector<2x32xf32>
    %540 = arith.mulf %539, %527 : vector<2x32xf32>
    %541 = arith.addf %538, %540 : vector<2x32xf32>
    %542 = arith.subf %541, %460 : vector<2x32xf32>
    %543 = tpu.concatenate %533, %542 in 1 : vector<2x32xf32>, vector<2x32xf32> -> vector<2x64xf32>
    %544 = math.tanh %543 : vector<2x64xf32>
    %545 = vector.extract_strided_slice %544 {offsets = [0, 0], sizes = [2, 32], strides = [1, 1]} : vector<2x64xf32> to vector<2x32xf32>
    %546 = vector.extract_strided_slice %544 {offsets = [0, 32], sizes = [2, 32], strides = [1, 1]} : vector<2x64xf32> to vector<2x32xf32>
    %547 = arith.subf %545, %546 : vector<2x32xf32>
    %548 = arith.mulf %547, %464 : vector<2x32xf32>
    %549 = arith.addf %548, %469 : vector<2x32xf32>
    %550 = arith.addf %545, %549 : vector<2x32xf32>
    %551 = arith.subf %550, %546 : vector<2x32xf32>
    %552 = arith.addf %551, %458 : vector<2x32xf32>
    %cst_94 = arith.constant -5.000000e-01 : f32
    %553 = vector.broadcast %cst_94 : f32 to vector<2x32xf32>
    %554 = arith.mulf %553, %549 : vector<2x32xf32>
    %cst_95 = arith.constant 6.000000e-01 : f32
    %555 = vector.broadcast %cst_95 : f32 to vector<2x32xf32>
    %556 = arith.mulf %555, %545 : vector<2x32xf32>
    %557 = arith.subf %554, %556 : vector<2x32xf32>
    %cst_96 = arith.constant 6.000000e-01 : f32
    %558 = vector.broadcast %cst_96 : f32 to vector<2x32xf32>
    %559 = arith.mulf %558, %546 : vector<2x32xf32>
    %560 = arith.addf %557, %559 : vector<2x32xf32>
    %561 = arith.subf %560, %460 : vector<2x32xf32>
    %562 = tpu.concatenate %552, %561 in 1 : vector<2x32xf32>, vector<2x32xf32> -> vector<2x64xf32>
    %563 = math.tanh %562 : vector<2x64xf32>
    %564 = vector.extract_strided_slice %563 {offsets = [0, 0], sizes = [2, 32], strides = [1, 1]} : vector<2x64xf32> to vector<2x32xf32>
    %565 = vector.extract_strided_slice %563 {offsets = [0, 32], sizes = [2, 32], strides = [1, 1]} : vector<2x64xf32> to vector<2x32xf32>
    %566 = arith.subf %564, %565 : vector<2x32xf32>
    %567 = arith.mulf %566, %464 : vector<2x32xf32>
    %568 = arith.addf %567, %469 : vector<2x32xf32>
    %569 = arith.addf %564, %568 : vector<2x32xf32>
    %570 = arith.subf %569, %565 : vector<2x32xf32>
    %571 = arith.addf %570, %458 : vector<2x32xf32>
    %cst_97 = arith.constant -5.000000e-01 : f32
    %572 = vector.broadcast %cst_97 : f32 to vector<2x32xf32>
    %573 = arith.mulf %572, %568 : vector<2x32xf32>
    %cst_98 = arith.constant 6.000000e-01 : f32
    %574 = vector.broadcast %cst_98 : f32 to vector<2x32xf32>
    %575 = arith.mulf %574, %564 : vector<2x32xf32>
    %576 = arith.subf %573, %575 : vector<2x32xf32>
    %cst_99 = arith.constant 6.000000e-01 : f32
    %577 = vector.broadcast %cst_99 : f32 to vector<2x32xf32>
    %578 = arith.mulf %577, %565 : vector<2x32xf32>
    %579 = arith.addf %576, %578 : vector<2x32xf32>
    %580 = arith.subf %579, %460 : vector<2x32xf32>
    %581 = tpu.concatenate %571, %580 in 1 : vector<2x32xf32>, vector<2x32xf32> -> vector<2x64xf32>
    %582 = math.tanh %581 : vector<2x64xf32>
    %583 = vector.extract_strided_slice %582 {offsets = [0, 0], sizes = [2, 32], strides = [1, 1]} : vector<2x64xf32> to vector<2x32xf32>
    %584 = vector.extract_strided_slice %582 {offsets = [0, 32], sizes = [2, 32], strides = [1, 1]} : vector<2x64xf32> to vector<2x32xf32>
    %585 = arith.subf %583, %584 : vector<2x32xf32>
    %586 = arith.mulf %585, %464 : vector<2x32xf32>
    %587 = arith.addf %586, %469 : vector<2x32xf32>
    %588 = arith.addf %583, %587 : vector<2x32xf32>
    %589 = arith.subf %588, %584 : vector<2x32xf32>
    %590 = arith.addf %589, %458 : vector<2x32xf32>
    %cst_100 = arith.constant -5.000000e-01 : f32
    %591 = vector.broadcast %cst_100 : f32 to vector<2x32xf32>
    %592 = arith.mulf %591, %587 : vector<2x32xf32>
    %cst_101 = arith.constant 6.000000e-01 : f32
    %593 = vector.broadcast %cst_101 : f32 to vector<2x32xf32>
    %594 = arith.mulf %593, %583 : vector<2x32xf32>
    %595 = arith.subf %592, %594 : vector<2x32xf32>
    %cst_102 = arith.constant 6.000000e-01 : f32
    %596 = vector.broadcast %cst_102 : f32 to vector<2x32xf32>
    %597 = arith.mulf %596, %584 : vector<2x32xf32>
    %598 = arith.addf %595, %597 : vector<2x32xf32>
    %599 = arith.subf %598, %460 : vector<2x32xf32>
    %600 = tpu.concatenate %590, %599 in 1 : vector<2x32xf32>, vector<2x32xf32> -> vector<2x64xf32>
    %601 = math.tanh %600 : vector<2x64xf32>
    %602 = vector.extract_strided_slice %601 {offsets = [0, 0], sizes = [2, 32], strides = [1, 1]} : vector<2x64xf32> to vector<2x32xf32>
    %603 = vector.extract_strided_slice %601 {offsets = [0, 32], sizes = [2, 32], strides = [1, 1]} : vector<2x64xf32> to vector<2x32xf32>
    %604 = arith.subf %602, %603 : vector<2x32xf32>
    %605 = arith.mulf %604, %464 : vector<2x32xf32>
    %606 = arith.addf %605, %469 : vector<2x32xf32>
    %607 = tpu.concatenate %153, %304, %455, %606 in 1 : vector<2x32xf32>, vector<2x32xf32>, vector<2x32xf32>, vector<2x32xf32> -> vector<2x128xf32>
    %c0_103 = arith.constant 0 : index
    %c0_104 = arith.constant 0 : index
    %608 = vector.load %arg3[%c0_103, %c0_104] : memref<128x16xf32, #tpu.memory_space<vmem>>, vector<128x16xf32>
    %cst_105 = arith.constant dense<0.000000e+00> : vector<2x16xf32>
    %609 = tpu.matmul %607, %608, %cst_105 {dimension_numbers = #tpu.dot_dimension_numbers<[1], [0], [0], [1], [0, 0, 1, 1], [], []>} : vector<2x128xf32>, vector<128x16xf32>, vector<2x16xf32> -> vector<2x16xf32>
    %c0_106 = arith.constant 0 : index
    %c0_107 = arith.constant 0 : index
    %610 = vector.load %arg4[%c0_106, %c0_107] : memref<1x16xf32, #tpu.memory_space<vmem>>, vector<1x16xf32>
    %611 = vector.broadcast %610 : vector<1x16xf32> to vector<2x16xf32>
    %612 = arith.addf %609, %611 : vector<2x16xf32>
    %c0_108 = arith.constant 0 : index
    %c0_109 = arith.constant 0 : index
    %613 = vector.load %arg5[%c0_108, %c0_109] : memref<2x16xf32, #tpu.memory_space<vmem>>, vector<2x16xf32>
    tpu.vector_store %arg5[%c0_108, %c0_109], %612 {strides = array<i32>} : memref<2x16xf32, #tpu.memory_space<vmem>>, vector<2x16xf32>,
    return
  }
}

</mosaic_0001>

<llo_original>
// kernel: tpu_custom_call.1
$region0: #{tpu_custom_call.1}
  #allocation0 [shape = 'u32[]', space=smem, size = 0x4, offset = 0x4, fixed_abs, tag = 'smem constant byte address 0x4 - core index']
  #allocation1 [shape = 'u32[144,128]{1,0:T(1,128)}', space=vmem, size = 0x12000, scoped, tag = 'internal scratch']
  %s0 = inlined_call_operand.vmem [shape: f32[32,32], index: 0, kind: input, shape index: {}]
  %s1 = inlined_call_operand.vmem [shape: f32[32,32], index: 1, kind: input, shape index: {}]
  %s2 = inlined_call_operand.vmem [shape: f32[1,32], index: 2, kind: input, shape index: {}]
  %s3 = inlined_call_operand.vmem [shape: f32[128,16], index: 3, kind: input, shape index: {}]
  %s4 = inlined_call_operand.vmem [shape: f32[1,16], index: 4, kind: input, shape index: {}]
  %s5 = inlined_call_operand.hbm [shape: f32[2,16], index: 5, kind: output, shape index: {}]
  %s6 = sld [smem:[#allocation0]]
  $region30: #{tpu_custom_call.1} parent=0
    _
  %s8 = ssub.s32 1, %s6
  %s9 = scalar_select 0, %s8, %s6
  $region1: #{tpu_custom_call.1} parent=0
    #allocation2 [shape = 'u8[1024]{0}', space=vmem, size = 0x400, scoped, tag = 'output window, operand 0, single buffered']
    #allocation3 [shape = 's32[1]{0}', space=sflag, size = 0x4, scoped, tag = 'scoped memory for tpu_custom_call.1']
    %10 = vsyncpa [#allocation3], 0
    // Predicated region
    $region2: #{tpu_custom_call.1} parent=1 // pred_check
      _
    $region3: #{tpu_custom_call.1} parent=1 // pred_check_branch
      %12 = sbr.rel (0) target = $region5
    $region4: #{tpu_custom_call.1} parent=1 // pred_region
      _
    $region5: #{tpu_custom_call.1} parent=1 // pred_fallthru
      _
    // Predicated region
    $region6: #{tpu_custom_call.1} parent=1 // pred_check
      _
    $region7: #{tpu_custom_call.1} parent=1 // pred_check_branch
      %14 = sbr.rel (0) target = $region9
    $region8: #{tpu_custom_call.1} parent=1 // pred_region
      _
    $region9: #{tpu_custom_call.1} parent=1 // pred_fallthru
      _
    // Predicated region
    $region10: #{tpu_custom_call.1} parent=1 // pred_check
      _
    $region11: #{tpu_custom_call.1} parent=1 // pred_check_branch
      %16 = sbr.rel (0) target = $region13
    $region12: #{tpu_custom_call.1} parent=1 // pred_region
      _
    $region13: #{tpu_custom_call.1} parent=1 // pred_fallthru
      _
    // Predicated region
    $region14: #{tpu_custom_call.1} parent=1 // pred_check
      _
    $region15: #{tpu_custom_call.1} parent=1 // pred_check_branch
      %18 = sbr.rel (0) target = $region17
    $region16: #{tpu_custom_call.1} parent=1 // pred_region
      _
    $region17: #{tpu_custom_call.1} parent=1 // pred_fallthru
      _
    // Predicated region
    $region18: #{tpu_custom_call.1} parent=1 // pred_check
      _
    $region19: #{tpu_custom_call.1} parent=1 // pred_check_branch
      %20 = sbr.rel (0) target = $region21
    $region20: #{tpu_custom_call.1} parent=1 // pred_region
      _
    $region21: #{tpu_custom_call.1} parent=1 // pred_fallthru
      _
    %v21 = vld [vmem:[%s0] sm:$0xff]
    %v22 = vld [vmem:[%s0 + $0x8] sm:$0xff]
    %v23 = vld [vmem:[%s0 + $0x10] sm:$0xff]
    %v24 = vld [vmem:[%s0 + $0x18] sm:$0xff]
    %v25 = vld [vmem:[%s1] sm:$0xff]
    %v26 = vld [vmem:[%s1 + $0x8] sm:$0xff]
    %v27 = vld [vmem:[%s1 + $0x10] sm:$0xff]
    %v28 = vld [vmem:[%s1 + $0x18] sm:$0xff]
    %v29 = vadd.f32 %v21, %v25
    %v30 = vadd.f32 %v22, %v26
    %v31 = vadd.f32 %v23, %v27
    %v32 = vadd.f32 %v24, %v28
    %v33 = vld [vmem:[%s2] sm:$0x1]
    %v35 = vlaneseq
    %v36 = vshrl.u32 %v35, 7
    %v37 = vsub.s32 0, %v36
    %v38 = vrot.slane %v33, %v37
    %v40 = vmul.f32 %v38, 0.5
    %v41 = vmul.f32 %v38, -50.0
    %v42 = vmul.f32 %v41, %v38
    %v43 = vmul.f32 %v42, 1.442695
    %v44 = vpow.pop %v43
    %v45 = vsub.f32 0.0, %v40
    %47 = vrot.lane.b32.xlu0 %v45, 32
    %v48 = vpop.permute.xlu0 %47
    %vm50 = vcmask 261120
    %v51 = vsel %vm50, %v38, %v48
    %v52 = vtanh.pop %v51
    %54 = vrot.lane.b32.xlu0 %v52, 96
    %v55 = vpop.permute.xlu0 %54
    %v57 = vsub.f32 %v52, %v55
    %v58 = vmul.f32 %v57, %v44
    %v59 = vadd.f32 %v58, %v52
    %v60 = vadd.f32 %v52, %v59
    %v61 = vsub.f32 %v60, %v55
    %v62 = vadd.f32 %v61, %v38
    %v63 = vmul.f32 %v59, -0.5
    %v64 = vmul.f32 %v52, 0.6
    %v65 = vsub.f32 %v63, %v64
    %67 = vrot.lane.b32.xlu0 %v64, 96
    %v68 = vpop.permute.xlu0 %67
    %v70 = vadd.f32 %v65, %v68
    %v71 = vsub.f32 %v70, %v40
    %73 = vrot.lane.b32.xlu0 %v71, 32
    %v74 = vpop.permute.xlu0 %73
    %v76 = vsel %vm50, %v62, %v74
    %v77 = vtanh.pop %v76
    %79 = vrot.lane.b32.xlu0 %v77, 96
    %v80 = vpop.permute.xlu0 %79
    %v82 = vsub.f32 %v77, %v80
    %v83 = vmul.f32 %v82, %v44
    %v84 = vadd.f32 %v83, %v52
    %v85 = vadd.f32 %v77, %v84
    %v86 = vsub.f32 %v85, %v80
    %v87 = vadd.f32 %v86, %v38
    %v88 = vmul.f32 %v84, -0.5
    %v89 = vmul.f32 %v77, 0.6
    %v90 = vsub.f32 %v88, %v89
    %92 = vrot.lane.b32.xlu0 %v89, 96
    %v93 = vpop.permute.xlu0 %92
    %v95 = vadd.f32 %v90, %v93
    %v96 = vsub.f32 %v95, %v40
    %98 = vrot.lane.b32.xlu0 %v96, 32
    %v99 = vpop.permute.xlu0 %98
    %v101 = vsel %vm50, %v87, %v99
    %v102 = vtanh.pop %v101
    %104 = vrot.lane.b32.xlu0 %v102, 96
    %v105 = vpop.permute.xlu0 %104
    %v107 = vsub.f32 %v102, %v105
    %v108 = vmul.f32 %v107, %v44
    %v109 = vadd.f32 %v108, %v52
    %v110 = vadd.f32 %v102, %v109
    %v111 = vsub.f32 %v110, %v105
    %v112 = vadd.f32 %v111, %v38
    %v113 = vmul.f32 %v109, -0.5
    %v114 = vmul.f32 %v102, 0.6
    %v115 = vsub.f32 %v113, %v114
    %117 = vrot.lane.b32.xlu0 %v114, 96
    %v118 = vpop.permute.xlu0 %117
    %v120 = vadd.f32 %v115, %v118
    %v121 = vsub.f32 %v120, %v40
    %123 = vrot.lane.b32.xlu0 %v121, 32
    %v124 = vpop.permute.xlu0 %123
    %v126 = vsel %vm50, %v112, %v124
    %v127 = vtanh.pop %v126
    %129 = vrot.lane.b32.xlu0 %v127, 96
    %v130 = vpop.permute.xlu0 %129
    %v132 = vsub.f32 %v127, %v130
    %v133 = vmul.f32 %v132, %v44
    %v134 = vadd.f32 %v133, %v52
    %v135 = vadd.f32 %v127, %v134
    %v136 = vsub.f32 %v135, %v130
    %v137 = vadd.f32 %v136, %v38
    %v138 = vmul.f32 %v134, -0.5
    %v139 = vmul.f32 %v127, 0.6
    %v140 = vsub.f32 %v138, %v139
    %142 = vrot.lane.b32.xlu0 %v139, 96
    %v143 = vpop.permute.xlu0 %142
    %v145 = vadd.f32 %v140, %v143
    %v146 = vsub.f32 %v145, %v40
    %148 = vrot.lane.b32.xlu0 %v146, 32
    %v149 = vpop.permute.xlu0 %148
    %v151 = vsel %vm50, %v137, %v149
    %v152 = vtanh.pop %v151
    %154 = vrot.lane.b32.xlu0 %v152, 96
    %v155 = vpop.permute.xlu0 %154
    %v157 = vsub.f32 %v152, %v155
    %v158 = vmul.f32 %v157, %v44
    %v159 = vadd.f32 %v158, %v52
    %v160 = vadd.f32 %v152, %v159
    %v161 = vsub.f32 %v160, %v155
    %v162 = vadd.f32 %v161, %v38
    %v163 = vmul.f32 %v159, -0.5
    %v164 = vmul.f32 %v152, 0.6
    %v165 = vsub.f32 %v163, %v164
    %167 = vrot.lane.b32.xlu0 %v164, 96
    %v168 = vpop.permute.xlu0 %167
    %v170 = vadd.f32 %v165, %v168
    %v171 = vsub.f32 %v170, %v40
    %173 = vrot.lane.b32.xlu0 %v171, 32
    %v174 = vpop.permute.xlu0 %173
    %v176 = vsel %vm50, %v162, %v174
    %v177 = vtanh.pop %v176
    %179 = vrot.lane.b32.xlu0 %v177, 96
    %v180 = vpop.permute.xlu0 %179
    %v182 = vsub.f32 %v177, %v180
    %v183 = vmul.f32 %v182, %v44
    %v184 = vadd.f32 %v183, %v52
    %v185 = vadd.f32 %v177, %v184
    %v186 = vsub.f32 %v185, %v180
    %v187 = vadd.f32 %v186, %v38
    %v188 = vmul.f32 %v184, -0.5
    %v189 = vmul.f32 %v177, 0.6
    %v190 = vsub.f32 %v188, %v189
    %192 = vrot.lane.b32.xlu0 %v189, 96
    %v193 = vpop.permute.xlu0 %192
    %v195 = vadd.f32 %v190, %v193
    %v196 = vsub.f32 %v195, %v40
    %198 = vrot.lane.b32.xlu0 %v196, 32
    %v199 = vpop.permute.xlu0 %198
    %v201 = vsel %vm50, %v187, %v199
    %v202 = vtanh.pop %v201
    %204 = vrot.lane.b32.xlu0 %v202, 96
    %v205 = vpop.permute.xlu0 %204
    %v207 = vsub.f32 %v202, %v205
    %v208 = vmul.f32 %v207, %v44
    %v209 = vadd.f32 %v208, %v52
    %v210 = vadd.f32 %v202, %v209
    %v211 = vsub.f32 %v210, %v205
    %v212 = vadd.f32 %v211, %v38
    %v213 = vmul.f32 %v209, -0.5
    %v214 = vmul.f32 %v202, 0.6
    %v215 = vsub.f32 %v213, %v214
    %217 = vrot.lane.b32.xlu0 %v214, 96
    %v218 = vpop.permute.xlu0 %217
    %v220 = vadd.f32 %v215, %v218
    %v221 = vsub.f32 %v220, %v40
    %223 = vrot.lane.b32.xlu0 %v221, 32
    %v224 = vpop.permute.xlu0 %223
    %v226 = vsel %vm50, %v212, %v224
    %v227 = vtanh.pop %v226
    %229 = vrot.lane.b32.xlu0 %v227, 96
    %v230 = vpop.permute.xlu0 %229
    %v232 = vsub.f32 %v227, %v230
    %v233 = vmul.f32 %v232, %v44
    %v234 = vadd.f32 %v233, %v52
    %v236 = vsel %vm50, %v234, 0
    %238 = vmatprep.subr.mxu0 0.0
    %239 = vmatpush1.msra.mxu0 %v29
    %240 = vmatprep.subr.mxu0 0.0
    %241 = vmatpush1.msra.mxu0 %v30
    %242 = vmatprep.subr.mxu0 0.0
    %243 = vmatpush1.msra.mxu0 %v31
    %244 = vmatprep.subr.mxu0 0.0
    %245 = vmatpush1.msra.mxu0 %v32
    %246 = vmatprep.subr.mxu0 0.0
    %247 = vmatpush1.msra.mxu0 0.0
    %248 = vmatprep.subr.mxu0 0.0
    %249 = vmatpush1.msra.mxu0 0.0
    %250 = vmatprep.subr.mxu0 0.0
    %251 = vmatpush1.msra.mxu0 0.0
    %252 = vmatprep.subr.mxu0 0.0
    %253 = vmatpush1.msra.mxu0 0.0
    %254 = vmatprep.subr.mxu0 0.0
    %255 = vmatpush1.msra.mxu0 0.0
    %256 = vmatprep.subr.mxu0 0.0
    %257 = vmatpush1.msra.mxu0 0.0
    %258 = vmatprep.subr.mxu0 0.0
    %259 = vmatpush1.msra.mxu0 0.0
    %260 = vmatprep.subr.mxu0 0.0
    %261 = vmatpush1.msra.mxu0 0.0
    %262 = vmatprep.subr.mxu0 0.0
    %263 = vmatpush1.msra.mxu0 0.0
    %264 = vmatprep.subr.mxu0 0.0
    %265 = vmatpush1.msra.mxu0 0.0
    %266 = vmatprep.subr.mxu0 0.0
    %267 = vmatpush1.msra.mxu0 0.0
    %268 = vmatprep.subr.mxu0 0.0
    %269 = vmatpush1.msra.mxu0 0.0
    %270 = vmatprep.subr.mxu0 0.0
    %271 = vmatpush1.msra.mxu0 0.0
    %272 = vmatprep.subr.mxu0 0.0
    %273 = vmatpush1.msra.mxu0 0.0
    %274 = vmatprep.subr.mxu0 0.0
    %275 = vmatpush1.msra.mxu0 0.0
    %276 = vmatprep.subr.mxu0 0.0
    %277 = vmatpush1.msra.mxu0 0.0
    %278 = vmatprep.subr.mxu0 0.0
    %279 = vmatpush1.msra.mxu0 0.0
    %280 = vmatprep.subr.mxu0 0.0
    %281 = vmatpush1.msra.mxu0 0.0
    %282 = vmatprep.subr.mxu0 0.0
    %283 = vmatpush1.msra.mxu0 0.0
    %284 = vmatprep.subr.mxu0 0.0
    %285 = vmatpush1.msra.mxu0 0.0
    %286 = vmatprep.subr.mxu0 0.0
    %287 = vmatpush1.msra.mxu0 0.0
    %288 = vmatprep.subr.mxu0 0.0
    %289 = vmatpush1.msra.mxu0 0.0
    %290 = vmatprep.subr.mxu0 0.0
    %291 = vmatpush1.msra.mxu0 0.0
    %292 = vmatprep.subr.mxu0 0.0
    %293 = vmatpush1.msra.mxu0 0.0
    %294 = vmatprep.subr.mxu0 0.0
    %295 = vmatpush1.msra.mxu0 0.0
    %296 = vmatprep.subr.mxu0 0.0
    %297 = vmatpush1.msra.mxu0 0.0
    %298 = vmatprep.subr.mxu0 0.0
    %299 = vmatpush1.msra.mxu0 0.0
    %300 = vmatprep.subr.mxu0 0.0
    %301 = vmatpush1.msra.mxu0 0.0
    %302 = vmatprep.mubr.f32.mxu0 0.0
    %303 = vmatmul.mubr.f32.gmra.mrb[0].mxu0 %v236
    %v304 = vpop.f32.mrb[0].mxu0
    %v305 = vadd.f32 %v38, %v304
    %v306 = vpop.f32.mrb[0].mxu0
    %307 = vdwg.mxu0
    %v308 = vmul.f32 %v305, 0.5
    %v309 = vmul.f32 %v305, -50.0
    %v310 = vmul.f32 %v309, %v305
    %v311 = vmul.f32 %v310, 1.442695
    %v312 = vpow.pop %v311
    %v313 = vsub.f32 0.0, %v308
    %315 = vrot.lane.b32.xlu0 %v313, 32
    %v316 = vpop.permute.xlu0 %315
    %v318 = vsel %vm50, %v305, %v316
    %v319 = vtanh.pop %v318
    %321 = vrot.lane.b32.xlu0 %v319, 96
    %v322 = vpop.permute.xlu0 %321
    %v324 = vsub.f32 %v319, %v322
    %v325 = vmul.f32 %v324, %v312
    %v326 = vadd.f32 %v325, %v319
    %v327 = vadd.f32 %v319, %v326
    %v328 = vsub.f32 %v327, %v322
    %v329 = vadd.f32 %v328, %v305
    %v330 = vmul.f32 %v326, -0.5
    %v331 = vmul.f32 %v319, 0.6
    %v332 = vsub.f32 %v330, %v331
    %334 = vrot.lane.b32.xlu0 %v331, 96
    %v335 = vpop.permute.xlu0 %334
    %v337 = vadd.f32 %v332, %v335
    %v338 = vsub.f32 %v337, %v308
    %340 = vrot.lane.b32.xlu0 %v338, 32
    %v341 = vpop.permute.xlu0 %340
    %v343 = vsel %vm50, %v329, %v341
    %v344 = vtanh.pop %v343
    %346 = vrot.lane.b32.xlu0 %v344, 96
    %v347 = vpop.permute.xlu0 %346
    %v349 = vsub.f32 %v344, %v347
    %v350 = vmul.f32 %v349, %v312
    %v351 = vadd.f32 %v350, %v319
    %v352 = vadd.f32 %v344, %v351
    %v353 = vsub.f32 %v352, %v347
    %v354 = vadd.f32 %v353, %v305
    %v355 = vmul.f32 %v351, -0.5
    %v356 = vmul.f32 %v344, 0.6
    %v357 = vsub.f32 %v355, %v356
    %359 = vrot.lane.b32.xlu0 %v356, 96
    %v360 = vpop.permute.xlu0 %359
    %v362 = vadd.f32 %v357, %v360
    %v363 = vsub.f32 %v362, %v308
    %365 = vrot.lane.b32.xlu0 %v363, 32
    %v366 = vpop.permute.xlu0 %365
    %v368 = vsel %vm50, %v354, %v366
    %v369 = vtanh.pop %v368
    %371 = vrot.lane.b32.xlu0 %v369, 96
    %v372 = vpop.permute.xlu0 %371
    %v374 = vsub.f32 %v369, %v372
    %v375 = vmul.f32 %v374, %v312
    %v376 = vadd.f32 %v375, %v319
    %v377 = vadd.f32 %v369, %v376
    %v378 = vsub.f32 %v377, %v372
    %v379 = vadd.f32 %v378, %v305
    %v380 = vmul.f32 %v376, -0.5
    %v381 = vmul.f32 %v369, 0.6
    %v382 = vsub.f32 %v380, %v381
    %384 = vrot.lane.b32.xlu0 %v381, 96
    %v385 = vpop.permute.xlu0 %384
    %v387 = vadd.f32 %v382, %v385
    %v388 = vsub.f32 %v387, %v308
    %390 = vrot.lane.b32.xlu0 %v388, 32
    %v391 = vpop.permute.xlu0 %390
    %v393 = vsel %vm50, %v379, %v391
    %v394 = vtanh.pop %v393
    %396 = vrot.lane.b32.xlu0 %v394, 96
    %v397 = vpop.permute.xlu0 %396
    %v399 = vsub.f32 %v394, %v397
    %v400 = vmul.f32 %v399, %v312
    %v401 = vadd.f32 %v400, %v319
    %v402 = vadd.f32 %v394, %v401
    %v403 = vsub.f32 %v402, %v397
    %v404 = vadd.f32 %v403, %v305
    %v405 = vmul.f32 %v401, -0.5
    %v406 = vmul.f32 %v394, 0.6
    %v407 = vsub.f32 %v405, %v406
    %409 = vrot.lane.b32.xlu0 %v406, 96
    %v410 = vpop.permute.xlu0 %409
    %v412 = vadd.f32 %v407, %v410
    %v413 = vsub.f32 %v412, %v308
    %415 = vrot.lane.b32.xlu0 %v413, 32
    %v416 = vpop.permute.xlu0 %415
    %v418 = vsel %vm50, %v404, %v416
    %v419 = vtanh.pop %v418
    %421 = vrot.lane.b32.xlu0 %v419, 96
    %v422 = vpop.permute.xlu0 %421
    %v424 = vsub.f32 %v419, %v422
    %v425 = vmul.f32 %v424, %v312
    %v426 = vadd.f32 %v425, %v319
    %v427 = vadd.f32 %v419, %v426
    %v428 = vsub.f32 %v427, %v422
    %v429 = vadd.f32 %v428, %v305
    %v430 = vmul.f32 %v426, -0.5
    %v431 = vmul.f32 %v419, 0.6
    %v432 = vsub.f32 %v430, %v431
    %434 = vrot.lane.b32.xlu0 %v431, 96
    %v435 = vpop.permute.xlu0 %434
    %v437 = vadd.f32 %v432, %v435
    %v438 = vsub.f32 %v437, %v308
    %440 = vrot.lane.b32.xlu0 %v438, 32
    %v441 = vpop.permute.xlu0 %440
    %v443 = vsel %vm50, %v429, %v441
    %v444 = vtanh.pop %v443
    %446 = vrot.lane.b32.xlu0 %v444, 96
    %v447 = vpop.permute.xlu0 %446
    %v449 = vsub.f32 %v444, %v447
    %v450 = vmul.f32 %v449, %v312
    %v451 = vadd.f32 %v450, %v319
    %v452 = vadd.f32 %v444, %v451
    %v453 = vsub.f32 %v452, %v447
    %v454 = vadd.f32 %v453, %v305
    %v455 = vmul.f32 %v451, -0.5
    %v456 = vmul.f32 %v444, 0.6
    %v457 = vsub.f32 %v455, %v456
    %459 = vrot.lane.b32.xlu0 %v456, 96
    %v460 = vpop.permute.xlu0 %459
    %v462 = vadd.f32 %v457, %v460
    %v463 = vsub.f32 %v462, %v308
    %465 = vrot.lane.b32.xlu0 %v463, 32
    %v466 = vpop.permute.xlu0 %465
    %v468 = vsel %vm50, %v454, %v466
    %v469 = vtanh.pop %v468
    %471 = vrot.lane.b32.xlu0 %v469, 96
    %v472 = vpop.permute.xlu0 %471
    %v474 = vsub.f32 %v469, %v472
    %v475 = vmul.f32 %v474, %v312
    %v476 = vadd.f32 %v475, %v319
    %v477 = vadd.f32 %v469, %v476
    %v478 = vsub.f32 %v477, %v472
    %v479 = vadd.f32 %v478, %v305
    %v480 = vmul.f32 %v476, -0.5
    %v481 = vmul.f32 %v469, 0.6
    %v482 = vsub.f32 %v480, %v481
    %484 = vrot.lane.b32.xlu0 %v481, 96
    %v485 = vpop.permute.xlu0 %484
    %v487 = vadd.f32 %v482, %v485
    %v488 = vsub.f32 %v487, %v308
    %490 = vrot.lane.b32.xlu0 %v488, 32
    %v491 = vpop.permute.xlu0 %490
    %v493 = vsel %vm50, %v479, %v491
    %v494 = vtanh.pop %v493
    %496 = vrot.lane.b32.xlu0 %v494, 96
    %v497 = vpop.permute.xlu0 %496
    %v499 = vsub.f32 %v494, %v497
    %v500 = vmul.f32 %v499, %v312
    %v501 = vadd.f32 %v500, %v319
    %v503 = vsel %vm50, %v501, 0
    %505 = vmatprep.subr.mxu0 0.0
    %506 = vmatpush1.msra.mxu0 %v29
    %507 = vmatprep.subr.mxu0 0.0
    %508 = vmatpush1.msra.mxu0 %v30
    %509 = vmatprep.subr.mxu0 0.0
    %510 = vmatpush1.msra.mxu0 %v31
    %511 = vmatprep.subr.mxu0 0.0
    %512 = vmatpush1.msra.mxu0 %v32
    %513 = vmatprep.subr.mxu0 0.0
    %514 = vmatpush1.msra.mxu0 0.0
    %515 = vmatprep.subr.mxu0 0.0
    %516 = vmatpush1.msra.mxu0 0.0
    %517 = vmatprep.subr.mxu0 0.0
    %518 = vmatpush1.msra.mxu0 0.0
    %519 = vmatprep.subr.mxu0 0.0
    %520 = vmatpush1.msra.mxu0 0.0
    %521 = vmatprep.subr.mxu0 0.0
    %522 = vmatpush1.msra.mxu0 0.0
    %523 = vmatprep.subr.mxu0 0.0
    %524 = vmatpush1.msra.mxu0 0.0
    %525 = vmatprep.subr.mxu0 0.0
    %526 = vmatpush1.msra.mxu0 0.0
    %527 = vmatprep.subr.mxu0 0.0
    %528 = vmatpush1.msra.mxu0 0.0
    %529 = vmatprep.subr.mxu0 0.0
    %530 = vmatpush1.msra.mxu0 0.0
    %531 = vmatprep.subr.mxu0 0.0
    %532 = vmatpush1.msra.mxu0 0.0
    %533 = vmatprep.subr.mxu0 0.0
    %534 = vmatpush1.msra.mxu0 0.0
    %535 = vmatprep.subr.mxu0 0.0
    %536 = vmatpush1.msra.mxu0 0.0
    %537 = vmatprep.subr.mxu0 0.0
    %538 = vmatpush1.msra.mxu0 0.0
    %539 = vmatprep.subr.mxu0 0.0
    %540 = vmatpush1.msra.mxu0 0.0
    %541 = vmatprep.subr.mxu0 0.0
    %542 = vmatpush1.msra.mxu0 0.0
    %543 = vmatprep.subr.mxu0 0.0
    %544 = vmatpush1.msra.mxu0 0.0
    %545 = vmatprep.subr.mxu0 0.0
    %546 = vmatpush1.msra.mxu0 0.0
    %547 = vmatprep.subr.mxu0 0.0
    %548 = vmatpush1.msra.mxu0 0.0
    %549 = vmatprep.subr.mxu0 0.0
    %550 = vmatpush1.msra.mxu0 0.0
    %551 = vmatprep.subr.mxu0 0.0
    %552 = vmatpush1.msra.mxu0 0.0
    %553 = vmatprep.subr.mxu0 0.0
    %554 = vmatpush1.msra.mxu0 0.0
    %555 = vmatprep.subr.mxu0 0.0
    %556 = vmatpush1.msra.mxu0 0.0
    %557 = vmatprep.subr.mxu0 0.0
    %558 = vmatpush1.msra.mxu0 0.0
    %559 = vmatprep.subr.mxu0 0.0
    %560 = vmatpush1.msra.mxu0 0.0
    %561 = vmatprep.subr.mxu0 0.0
    %562 = vmatpush1.msra.mxu0 0.0
    %563 = vmatprep.subr.mxu0 0.0
    %564 = vmatpush1.msra.mxu0 0.0
    %565 = vmatprep.subr.mxu0 0.0
    %566 = vmatpush1.msra.mxu0 0.0
    %567 = vmatprep.subr.mxu0 0.0
    %568 = vmatpush1.msra.mxu0 0.0
    %569 = vmatprep.mubr.f32.mxu0 0.0
    %570 = vmatmul.mubr.f32.gmra.mrb[0].mxu0 %v503
    %v571 = vpop.f32.mrb[0].mxu0
    %v572 = vadd.f32 %v38, %v571
    %v573 = vpop.f32.mrb[0].mxu0
    %574 = vdwg.mxu0
    %v575 = vmul.f32 %v572, 0.5
    %v576 = vmul.f32 %v572, -50.0
    %v577 = vmul.f32 %v576, %v572
    %v578 = vmul.f32 %v577, 1.442695
    %v579 = vpow.pop %v578
    %v580 = vsub.f32 0.0, %v575
    %582 = vrot.lane.b32.xlu0 %v580, 32
    %v583 = vpop.permute.xlu0 %582
    %v585 = vsel %vm50, %v572, %v583
    %v586 = vtanh.pop %v585
    %588 = vrot.lane.b32.xlu0 %v586, 96
    %v589 = vpop.permute.xlu0 %588
    %v591 = vsub.f32 %v586, %v589
    %v592 = vmul.f32 %v591, %v579
    %v593 = vadd.f32 %v592, %v586
    %v594 = vadd.f32 %v586, %v593
    %v595 = vsub.f32 %v594, %v589
    %v596 = vadd.f32 %v595, %v572
    %v597 = vmul.f32 %v593, -0.5
    %v598 = vmul.f32 %v586, 0.6
    %v599 = vsub.f32 %v597, %v598
    %601 = vrot.lane.b32.xlu0 %v598, 96
    %v602 = vpop.permute.xlu0 %601
    %v604 = vadd.f32 %v599, %v602
    %v605 = vsub.f32 %v604, %v575
    %607 = vrot.lane.b32.xlu0 %v605, 32
    %v608 = vpop.permute.xlu0 %607
    %v610 = vsel %vm50, %v596, %v608
    %v611 = vtanh.pop %v610
    %613 = vrot.lane.b32.xlu0 %v611, 96
    %v614 = vpop.permute.xlu0 %613
    %v616 = vsub.f32 %v611, %v614
    %v617 = vmul.f32 %v616, %v579
    %v618 = vadd.f32 %v617, %v586
    %v619 = vadd.f32 %v611, %v618
    %v620 = vsub.f32 %v619, %v614
    %v621 = vadd.f32 %v620, %v572
    %v622 = vmul.f32 %v618, -0.5
    %v623 = vmul.f32 %v611, 0.6
    %v624 = vsub.f32 %v622, %v623
    %626 = vrot.lane.b32.xlu0 %v623, 96
    %v627 = vpop.permute.xlu0 %626
    %v629 = vadd.f32 %v624, %v627
    %v630 = vsub.f32 %v629, %v575
    %632 = vrot.lane.b32.xlu0 %v630, 32
    %v633 = vpop.permute.xlu0 %632
    %v635 = vsel %vm50, %v621, %v633
    %v636 = vtanh.pop %v635
    %638 = vrot.lane.b32.xlu0 %v636, 96
    %v639 = vpop.permute.xlu0 %638
    %v641 = vsub.f32 %v636, %v639
    %v642 = vmul.f32 %v641, %v579
    %v643 = vadd.f32 %v642, %v586
    %v644 = vadd.f32 %v636, %v643
    %v645 = vsub.f32 %v644, %v639
    %v646 = vadd.f32 %v645, %v572
    %v647 = vmul.f32 %v643, -0.5
    %v648 = vmul.f32 %v636, 0.6
    %v649 = vsub.f32 %v647, %v648
    %651 = vrot.lane.b32.xlu0 %v648, 96
    %v652 = vpop.permute.xlu0 %651
    %v654 = vadd.f32 %v649, %v652
    %v655 = vsub.f32 %v654, %v575
    %657 = vrot.lane.b32.xlu0 %v655, 32
    %v658 = vpop.permute.xlu0 %657
    %v660 = vsel %vm50, %v646, %v658
    %v661 = vtanh.pop %v660
    %663 = vrot.lane.b32.xlu0 %v661, 96
    %v664 = vpop.permute.xlu0 %663
    %v666 = vsub.f32 %v661, %v664
    %v667 = vmul.f32 %v666, %v579
    %v668 = vadd.f32 %v667, %v586
    %v669 = vadd.f32 %v661, %v668
    %v670 = vsub.f32 %v669, %v664
    %v671 = vadd.f32 %v670, %v572
    %v672 = vmul.f32 %v668, -0.5
    %v673 = vmul.f32 %v661, 0.6
    %v674 = vsub.f32 %v672, %v673
    %676 = vrot.lane.b32.xlu0 %v673, 96
    %v677 = vpop.permute.xlu0 %676
    %v679 = vadd.f32 %v674, %v677
    %v680 = vsub.f32 %v679, %v575
    %682 = vrot.lane.b32.xlu0 %v680, 32
    %v683 = vpop.permute.xlu0 %682
    %v685 = vsel %vm50, %v671, %v683
    %v686 = vtanh.pop %v685
    %688 = vrot.lane.b32.xlu0 %v686, 96
    %v689 = vpop.permute.xlu0 %688
    %v691 = vsub.f32 %v686, %v689
    %v692 = vmul.f32 %v691, %v579
    %v693 = vadd.f32 %v692, %v586
    %v694 = vadd.f32 %v686, %v693
    %v695 = vsub.f32 %v694, %v689
    %v696 = vadd.f32 %v695, %v572
    %v697 = vmul.f32 %v693, -0.5
    %v698 = vmul.f32 %v686, 0.6
    %v699 = vsub.f32 %v697, %v698
    %701 = vrot.lane.b32.xlu0 %v698, 96
    %v702 = vpop.permute.xlu0 %701
    %v704 = vadd.f32 %v699, %v702
    %v705 = vsub.f32 %v704, %v575
    %707 = vrot.lane.b32.xlu0 %v705, 32
    %v708 = vpop.permute.xlu0 %707
    %v710 = vsel %vm50, %v696, %v708
    %v711 = vtanh.pop %v710
    %713 = vrot.lane.b32.xlu0 %v711, 96
    %v714 = vpop.permute.xlu0 %713
    %v716 = vsub.f32 %v711, %v714
    %v717 = vmul.f32 %v716, %v579
    %v718 = vadd.f32 %v717, %v586
    %v719 = vadd.f32 %v711, %v718
    %v720 = vsub.f32 %v719, %v714
    %v721 = vadd.f32 %v720, %v572
    %v722 = vmul.f32 %v718, -0.5
    %v723 = vmul.f32 %v711, 0.6
    %v724 = vsub.f32 %v722, %v723
    %726 = vrot.lane.b32.xlu0 %v723, 96
    %v727 = vpop.permute.xlu0 %726
    %v729 = vadd.f32 %v724, %v727
    %v730 = vsub.f32 %v729, %v575
    %732 = vrot.lane.b32.xlu0 %v730, 32
    %v733 = vpop.permute.xlu0 %732
    %v735 = vsel %vm50, %v721, %v733
    %v736 = vtanh.pop %v735
    %738 = vrot.lane.b32.xlu0 %v736, 96
    %v739 = vpop.permute.xlu0 %738
    %v741 = vsub.f32 %v736, %v739
    %v742 = vmul.f32 %v741, %v579
    %v743 = vadd.f32 %v742, %v586
    %v744 = vadd.f32 %v736, %v743
    %v745 = vsub.f32 %v744, %v739
    %v746 = vadd.f32 %v745, %v572
    %v747 = vmul.f32 %v743, -0.5
    %v748 = vmul.f32 %v736, 0.6
    %v749 = vsub.f32 %v747, %v748
    %751 = vrot.lane.b32.xlu0 %v748, 96
    %v752 = vpop.permute.xlu0 %751
    %v754 = vadd.f32 %v749, %v752
    %v755 = vsub.f32 %v754, %v575
    %757 = vrot.lane.b32.xlu0 %v755, 32
    %v758 = vpop.permute.xlu0 %757
    %v760 = vsel %vm50, %v746, %v758
    %v761 = vtanh.pop %v760
    %763 = vrot.lane.b32.xlu0 %v761, 96
    %v764 = vpop.permute.xlu0 %763
    %v766 = vsub.f32 %v761, %v764
    %v767 = vmul.f32 %v766, %v579
    %v768 = vadd.f32 %v767, %v586
    %v770 = vsel %vm50, %v768, 0
    %772 = vmatprep.subr.mxu0 0.0
    %773 = vmatpush1.msra.mxu0 %v29
    %774 = vmatprep.subr.mxu0 0.0
    %775 = vmatpush1.msra.mxu0 %v30
    %776 = vmatprep.subr.mxu0 0.0
    %777 = vmatpush1.msra.mxu0 %v31
    %778 = vmatprep.subr.mxu0 0.0
    %779 = vmatpush1.msra.mxu0 %v32
    %780 = vmatprep.subr.mxu0 0.0
    %781 = vmatpush1.msra.mxu0 0.0
    %782 = vmatprep.subr.mxu0 0.0
    %783 = vmatpush1.msra.mxu0 0.0
    %784 = vmatprep.subr.mxu0 0.0
    %785 = vmatpush1.msra.mxu0 0.0
    %786 = vmatprep.subr.mxu0 0.0
    %787 = vmatpush1.msra.mxu0 0.0
    %788 = vmatprep.subr.mxu0 0.0
    %789 = vmatpush1.msra.mxu0 0.0
    %790 = vmatprep.subr.mxu0 0.0
    %791 = vmatpush1.msra.mxu0 0.0
    %792 = vmatprep.subr.mxu0 0.0
    %793 = vmatpush1.msra.mxu0 0.0
    %794 = vmatprep.subr.mxu0 0.0
    %795 = vmatpush1.msra.mxu0 0.0
    %796 = vmatprep.subr.mxu0 0.0
    %797 = vmatpush1.msra.mxu0 0.0
    %798 = vmatprep.subr.mxu0 0.0
    %799 = vmatpush1.msra.mxu0 0.0
    %800 = vmatprep.subr.mxu0 0.0
    %801 = vmatpush1.msra.mxu0 0.0
    %802 = vmatprep.subr.mxu0 0.0
    %803 = vmatpush1.msra.mxu0 0.0
    %804 = vmatprep.subr.mxu0 0.0
    %805 = vmatpush1.msra.mxu0 0.0
    %806 = vmatprep.subr.mxu0 0.0
    %807 = vmatpush1.msra.mxu0 0.0
    %808 = vmatprep.subr.mxu0 0.0
    %809 = vmatpush1.msra.mxu0 0.0
    %810 = vmatprep.subr.mxu0 0.0
    %811 = vmatpush1.msra.mxu0 0.0
    %812 = vmatprep.subr.mxu0 0.0
    %813 = vmatpush1.msra.mxu0 0.0
    %814 = vmatprep.subr.mxu0 0.0
    %815 = vmatpush1.msra.mxu0 0.0
    %816 = vmatprep.subr.mxu0 0.0
    %817 = vmatpush1.msra.mxu0 0.0
    %818 = vmatprep.subr.mxu0 0.0
    %819 = vmatpush1.msra.mxu0 0.0
    %820 = vmatprep.subr.mxu0 0.0
    %821 = vmatpush1.msra.mxu0 0.0
    %822 = vmatprep.subr.mxu0 0.0
    %823 = vmatpush1.msra.mxu0 0.0
    %824 = vmatprep.subr.mxu0 0.0
    %825 = vmatpush1.msra.mxu0 0.0
    %826 = vmatprep.subr.mxu0 0.0
    %827 = vmatpush1.msra.mxu0 0.0
    %828 = vmatprep.subr.mxu0 0.0
    %829 = vmatpush1.msra.mxu0 0.0
    %830 = vmatprep.subr.mxu0 0.0
    %831 = vmatpush1.msra.mxu0 0.0
    %832 = vmatprep.subr.mxu0 0.0
    %833 = vmatpush1.msra.mxu0 0.0
    %834 = vmatprep.subr.mxu0 0.0
    %835 = vmatpush1.msra.mxu0 0.0
    %836 = vmatprep.mubr.f32.mxu0 0.0
    %837 = vmatmul.mubr.f32.gmra.mrb[0].mxu0 %v770
    %v838 = vpop.f32.mrb[0].mxu0
    %v839 = vadd.f32 %v38, %v838
    %v840 = vpop.f32.mrb[0].mxu0
    %841 = vdwg.mxu0
    %v842 = vmul.f32 %v839, 0.5
    %v843 = vmul.f32 %v839, -50.0
    %v844 = vmul.f32 %v843, %v839
    %v845 = vmul.f32 %v844, 1.442695
    %v846 = vpow.pop %v845
    %v847 = vsub.f32 0.0, %v842
    %849 = vrot.lane.b32.xlu0 %v847, 32
    %v850 = vpop.permute.xlu0 %849
    %v852 = vsel %vm50, %v839, %v850
    %v853 = vtanh.pop %v852
    %855 = vrot.lane.b32.xlu0 %v853, 96
    %v856 = vpop.permute.xlu0 %855
    %v858 = vsub.f32 %v853, %v856
    %v859 = vmul.f32 %v858, %v846
    %v860 = vadd.f32 %v859, %v853
    %v861 = vadd.f32 %v853, %v860
    %v862 = vsub.f32 %v861, %v856
    %v863 = vadd.f32 %v862, %v839
    %v864 = vmul.f32 %v860, -0.5
    %v865 = vmul.f32 %v853, 0.6
    %v866 = vsub.f32 %v864, %v865
    %868 = vrot.lane.b32.xlu0 %v865, 96
    %v869 = vpop.permute.xlu0 %868
    %v871 = vadd.f32 %v866, %v869
    %v872 = vsub.f32 %v871, %v842
    %874 = vrot.lane.b32.xlu0 %v872, 32
    %v875 = vpop.permute.xlu0 %874
    %v877 = vsel %vm50, %v863, %v875
    %v878 = vtanh.pop %v877
    %880 = vrot.lane.b32.xlu0 %v878, 96
    %v881 = vpop.permute.xlu0 %880
    %v883 = vsub.f32 %v878, %v881
    %v884 = vmul.f32 %v883, %v846
    %v885 = vadd.f32 %v884, %v853
    %v886 = vadd.f32 %v878, %v885
    %v887 = vsub.f32 %v886, %v881
    %v888 = vadd.f32 %v887, %v839
    %v889 = vmul.f32 %v885, -0.5
    %v890 = vmul.f32 %v878, 0.6
    %v891 = vsub.f32 %v889, %v890
    %893 = vrot.lane.b32.xlu0 %v890, 96
    %v894 = vpop.permute.xlu0 %893
    %v896 = vadd.f32 %v891, %v894
    %v897 = vsub.f32 %v896, %v842
    %899 = vrot.lane.b32.xlu0 %v897, 32
    %v900 = vpop.permute.xlu0 %899
    %v902 = vsel %vm50, %v888, %v900
    %v903 = vtanh.pop %v902
    %905 = vrot.lane.b32.xlu0 %v903, 96
    %v906 = vpop.permute.xlu0 %905
    %v908 = vsub.f32 %v903, %v906
    %v909 = vmul.f32 %v908, %v846
    %v910 = vadd.f32 %v909, %v853
    %v911 = vadd.f32 %v903, %v910
    %v912 = vsub.f32 %v911, %v906
    %v913 = vadd.f32 %v912, %v839
    %v914 = vmul.f32 %v910, -0.5
    %v915 = vmul.f32 %v903, 0.6
    %v916 = vsub.f32 %v914, %v915
    %918 = vrot.lane.b32.xlu0 %v915, 96
    %v919 = vpop.permute.xlu0 %918
    %v921 = vadd.f32 %v916, %v919
    %v922 = vsub.f32 %v921, %v842
    %924 = vrot.lane.b32.xlu0 %v922, 32
    %v925 = vpop.permute.xlu0 %924
    %v927 = vsel %vm50, %v913, %v925
    %v928 = vtanh.pop %v927
    %930 = vrot.lane.b32.xlu0 %v928, 96
    %v931 = vpop.permute.xlu0 %930
    %v933 = vsub.f32 %v928, %v931
    %v934 = vmul.f32 %v933, %v846
    %v935 = vadd.f32 %v934, %v853
    %v936 = vadd.f32 %v928, %v935
    %v937 = vsub.f32 %v936, %v931
    %v938 = vadd.f32 %v937, %v839
    %v939 = vmul.f32 %v935, -0.5
    %v940 = vmul.f32 %v928, 0.6
    %v941 = vsub.f32 %v939, %v940
    %943 = vrot.lane.b32.xlu0 %v940, 96
    %v944 = vpop.permute.xlu0 %943
    %v946 = vadd.f32 %v941, %v944
    %v947 = vsub.f32 %v946, %v842
    %949 = vrot.lane.b32.xlu0 %v947, 32
    %v950 = vpop.permute.xlu0 %949
    %v952 = vsel %vm50, %v938, %v950
    %v953 = vtanh.pop %v952
    %955 = vrot.lane.b32.xlu0 %v953, 96
    %v956 = vpop.permute.xlu0 %955
    %v958 = vsub.f32 %v953, %v956
    %v959 = vmul.f32 %v958, %v846
    %v960 = vadd.f32 %v959, %v853
    %v961 = vadd.f32 %v953, %v960
    %v962 = vsub.f32 %v961, %v956
    %v963 = vadd.f32 %v962, %v839
    %v964 = vmul.f32 %v960, -0.5
    %v965 = vmul.f32 %v953, 0.6
    %v966 = vsub.f32 %v964, %v965
    %968 = vrot.lane.b32.xlu0 %v965, 96
    %v969 = vpop.permute.xlu0 %968
    %v971 = vadd.f32 %v966, %v969
    %v972 = vsub.f32 %v971, %v842
    %974 = vrot.lane.b32.xlu0 %v972, 32
    %v975 = vpop.permute.xlu0 %974
    %v977 = vsel %vm50, %v963, %v975
    %v978 = vtanh.pop %v977
    %980 = vrot.lane.b32.xlu0 %v978, 96
    %v981 = vpop.permute.xlu0 %980
    %v983 = vsub.f32 %v978, %v981
    %v984 = vmul.f32 %v983, %v846
    %v985 = vadd.f32 %v984, %v853
    %v986 = vadd.f32 %v978, %v985
    %v987 = vsub.f32 %v986, %v981
    %v988 = vadd.f32 %v987, %v839
    %v989 = vmul.f32 %v985, -0.5
    %v990 = vmul.f32 %v978, 0.6
    %v991 = vsub.f32 %v989, %v990
    %993 = vrot.lane.b32.xlu0 %v990, 96
    %v994 = vpop.permute.xlu0 %993
    %v996 = vadd.f32 %v991, %v994
    %v997 = vsub.f32 %v996, %v842
    %999 = vrot.lane.b32.xlu0 %v997, 32
    %v1000 = vpop.permute.xlu0 %999
    %v1002 = vsel %vm50, %v988, %v1000
    %v1003 = vtanh.pop %v1002
    %1005 = vrot.lane.b32.xlu0 %v1003, 96
    %v1006 = vpop.permute.xlu0 %1005
    %v1008 = vsub.f32 %v1003, %v1006
    %v1009 = vmul.f32 %v1008, %v846
    %v1010 = vadd.f32 %v1009, %v853
    %v1011 = vadd.f32 %v1003, %v1010
    %v1012 = vsub.f32 %v1011, %v1006
    %v1013 = vadd.f32 %v1012, %v839
    %v1014 = vmul.f32 %v1010, -0.5
    %v1015 = vmul.f32 %v1003, 0.6
    %v1016 = vsub.f32 %v1014, %v1015
    %1018 = vrot.lane.b32.xlu0 %v1015, 96
    %v1019 = vpop.permute.xlu0 %1018
    %v1021 = vadd.f32 %v1016, %v1019
    %v1022 = vsub.f32 %v1021, %v842
    %1024 = vrot.lane.b32.xlu0 %v1022, 32
    %v1025 = vpop.permute.xlu0 %1024
    %v1027 = vsel %vm50, %v1013, %v1025
    %v1028 = vtanh.pop %v1027
    %1030 = vrot.lane.b32.xlu0 %v1028, 96
    %v1031 = vpop.permute.xlu0 %1030
    %v1033 = vsub.f32 %v1028, %v1031
    %v1034 = vmul.f32 %v1033, %v846
    %v1035 = vadd.f32 %v1034, %v853
    %1036 = vrot.lane.b32.xlu0 %v501, 32
    %v1037 = vpop.permute.xlu0 %1036
    %1039 = vrot.lane.b32.xlu0 %v768, 64
    %v1040 = vpop.permute.xlu0 %1039
    %1043 = vrot.lane.b32.xlu0 %v1035, 96
    %v1044 = vpop.permute.xlu0 %1043
    %v1046 = vsel %vm50, %v234, %v1037
    %vm1047 = vcmask 523264
    %v1048 = vsel %vm1047, %v1046, %v1040
    %vm1049 = vcmask 785408
    %v1050 = vsel %vm1049, %v1048, %v1044
    %v1051 = vld [vmem:[%s3] sm:$0xff]
    %v1052 = vld [vmem:[%s3 + $0x8] sm:$0xff]
    %v1053 = vld [vmem:[%s3 + $0x10] sm:$0xff]
    %v1054 = vld [vmem:[%s3 + $0x18] sm:$0xff]
    %v1055 = vld [vmem:[%s3 + $0x20] sm:$0xff]
    %v1056 = vld [vmem:[%s3 + $0x28] sm:$0xff]
    %v1057 = vld [vmem:[%s3 + $0x30] sm:$0xff]
    %v1058 = vld [vmem:[%s3 + $0x38] sm:$0xff]
    %v1059 = vld [vmem:[%s3 + $0x40] sm:$0xff]
    %v1060 = vld [vmem:[%s3 + $0x48] sm:$0xff]
    %v1061 = vld [vmem:[%s3 + $0x50] sm:$0xff]
    %v1062 = vld [vmem:[%s3 + $0x58] sm:$0xff]
    %v1063 = vld [vmem:[%s3 + $0x60] sm:$0xff]
    %v1064 = vld [vmem:[%s3 + $0x68] sm:$0xff]
    %v1065 = vld [vmem:[%s3 + $0x70] sm:$0xff]
    %v1066 = vld [vmem:[%s3 + $0x78] sm:$0xff]
    %v1067 = vld [vmem:[%s4] sm:$0x1]
    %v1069 = vlaneseq
    %v1070 = vshrl.u32 %v1069, 7
    %v1071 = vsub.s32 0, %v1070
    %v1072 = vrot.slane %v1067, %v1071
    %1074 = vmatprep.subr.mxu0 0.0
    %1075 = vmatpush1.msra.mxu0 %v1051
    %1076 = vmatprep.subr.mxu0 0.0
    %1077 = vmatpush1.msra.mxu0 %v1052
    %1078 = vmatprep.subr.mxu0 0.0
    %1079 = vmatpush1.msra.mxu0 %v1053
    %1080 = vmatprep.subr.mxu0 0.0
    %1081 = vmatpush1.msra.mxu0 %v1054
    %1082 = vmatprep.subr.mxu0 0.0
    %1083 = vmatpush1.msra.mxu0 %v1055
    %1084 = vmatprep.subr.mxu0 0.0
    %1085 = vmatpush1.msra.mxu0 %v1056
    %1086 = vmatprep.subr.mxu0 0.0
    %1087 = vmatpush1.msra.mxu0 %v1057
    %1088 = vmatprep.subr.mxu0 0.0
    %1089 = vmatpush1.msra.mxu0 %v1058
    %1090 = vmatprep.subr.mxu0 0.0
    %1091 = vmatpush1.msra.mxu0 %v1059
    %1092 = vmatprep.subr.mxu0 0.0
    %1093 = vmatpush1.msra.mxu0 %v1060
    %1094 = vmatprep.subr.mxu0 0.0
    %1095 = vmatpush1.msra.mxu0 %v1061
    %1096 = vmatprep.subr.mxu0 0.0
    %1097 = vmatpush1.msra.mxu0 %v1062
    %1098 = vmatprep.subr.mxu0 0.0
    %1099 = vmatpush1.msra.mxu0 %v1063
    %1100 = vmatprep.subr.mxu0 0.0
    %1101 = vmatpush1.msra.mxu0 %v1064
    %1102 = vmatprep.subr.mxu0 0.0
    %1103 = vmatpush1.msra.mxu0 %v1065
    %1104 = vmatprep.subr.mxu0 0.0
    %1105 = vmatpush1.msra.mxu0 %v1066
    %1106 = vmatprep.subr.mxu0 0.0
    %1107 = vmatpush1.msra.mxu0 0.0
    %1108 = vmatprep.subr.mxu0 0.0
    %1109 = vmatpush1.msra.mxu0 0.0
    %1110 = vmatprep.subr.mxu0 0.0
    %1111 = vmatpush1.msra.mxu0 0.0
    %1112 = vmatprep.subr.mxu0 0.0
    %1113 = vmatpush1.msra.mxu0 0.0
    %1114 = vmatprep.subr.mxu0 0.0
    %1115 = vmatpush1.msra.mxu0 0.0
    %1116 = vmatprep.subr.mxu0 0.0
    %1117 = vmatpush1.msra.mxu0 0.0
    %1118 = vmatprep.subr.mxu0 0.0
    %1119 = vmatpush1.msra.mxu0 0.0
    %1120 = vmatprep.subr.mxu0 0.0
    %1121 = vmatpush1.msra.mxu0 0.0
    %1122 = vmatprep.subr.mxu0 0.0
    %1123 = vmatpush1.msra.mxu0 0.0
    %1124 = vmatprep.subr.mxu0 0.0
    %1125 = vmatpush1.msra.mxu0 0.0
    %1126 = vmatprep.subr.mxu0 0.0
    %1127 = vmatpush1.msra.mxu0 0.0
    %1128 = vmatprep.subr.mxu0 0.0
    %1129 = vmatpush1.msra.mxu0 0.0
    %1130 = vmatprep.subr.mxu0 0.0
    %1131 = vmatpush1.msra.mxu0 0.0
    %1132 = vmatprep.subr.mxu0 0.0
    %1133 = vmatpush1.msra.mxu0 0.0
    %1134 = vmatprep.subr.mxu0 0.0
    %1135 = vmatpush1.msra.mxu0 0.0
    %1136 = vmatprep.subr.mxu0 0.0
    %1137 = vmatpush1.msra.mxu0 0.0
    %1138 = vmatprep.mubr.f32.mxu0 0.0
    %1139 = vmatmul.mubr.f32.gmra.mrb[0].mxu0 %v1050
    %v1140 = vpop.f32.mrb[0].mxu0
    %v1141 = vadd.f32 %v1072, %v1140
    %v1142 = vpop.f32.mrb[0].mxu0
    %1143 = vdwg.mxu0
    %vm1144 = vcmask 123904
    %1145 = vst.msk [vmem:[#allocation2] sm:$0x3] %vm1144, %v1141
    // Predicated region
    $region22: #{tpu_custom_call.1} parent=1 // pred_check
      _
    $region23: #{tpu_custom_call.1} parent=1 // pred_check_branch
      %1147 = sbr.rel (0) target = $region25
    $region24: #{tpu_custom_call.1} parent=1 // pred_region
      %s1149 = ssub.s32 32, 32
      %1150 = vsyncadd [#allocation3], %s1149
      %s1152 = sshll.u32 [#allocation2], 4
      %s1153 = int_to_ptr.vmem [resolvable:$true] %s1152
      %1155 = dma.vmem_to_hbm [thread:$0]  %s1153, 32, %s5, [#allocation3]
    $region25: #{tpu_custom_call.1} parent=1 // pred_fallthru
      _
    // Predicated region
    $region26: #{tpu_custom_call.1} parent=1 // pred_check
      _
    $region27: #{tpu_custom_call.1} parent=1 // pred_check_branch
      %1157 = sbr.rel (0) target = $region29
    $region28: #{tpu_custom_call.1} parent=1 // pred_region
      %1158 = dma.done [#allocation3], 32
    $region29: #{tpu_custom_call.1} parent=1 // pred_fallthru
      _
    %1159 = vsyncpa [#allocation3], 1

</llo_original>
